<compile_context>
chip_gen: v7x
topology: tpu7x:2x2x1
jax: 0.10.0
libtpu: 0.0.40
codegen_flags: <defaults>
</compile_context>

<pallas_src>
import jax
import jax.numpy as jnp
from jax.experimental import pallas as pl
from jax.experimental.pallas import tpu as pltpu

# ----------------------------- config (small shapes) -----------------------------
B = 8                 # batch
SEQ = 12              # token sequence length
BERT_DIM = 768
EMB_DIM = 32
N_CAT = 2             # len(cat_vocab_sizes)
N_HIER = 6            # len(hier_vocab_sizes)
CAT_VOCAB = 1000      # scaled-down vocab (module uses 10000)
HIER_VOCAB = 1000
BERT_VOCAB = 1000
NUM_CLASSES = 16
NUM_CLASSES_PAD = 128  # lane-dense padded logits width inside the kernel
HID1, HID2 = 512, 256
D_FEAT = BERT_DIM + EMB_DIM * N_CAT + EMB_DIM * N_HIER   # 1024 (clean MXU K)
D_IN = D_FEAT + 1                                        # PyTorch total_input_dim = 1025
BN_EPS = 1e-5

# packed-aux column offsets (all 128-aligned)
O_S1 = 0
O_W1A = O_S1 + HID1          # 512
O_SH1 = O_W1A + HID1         # 1024
O_S2 = O_SH1 + HID1          # 1536
O_SH2 = O_S2 + HID2          # 1792
O_B3 = O_SH2 + HID2          # 2048
AUX_W = O_B3 + NUM_CLASSES_PAD  # 2176


# ----------------------------- Pallas kernel (hot path) -----------------------------
def mlp_head_kernel(x_ref, amt_ref, w1_ref, w2_ref, w3_ref, aux_ref, out_ref):
    # static 128-aligned views into the single packed f32 side-input (no copies)
    s1 = aux_ref[:, O_S1:O_W1A]     # (1, 512)  BN1 scale
    w1a = aux_ref[:, O_W1A:O_SH1]   # (1, 512)  fc1 'amount' row (pre-scaled by s1)
    sh1 = aux_ref[:, O_SH1:O_S2]    # (1, 512)  b1*s1 + t1
    s2 = aux_ref[:, O_S2:O_SH2]     # (1, 256)  BN2 scale
    sh2 = aux_ref[:, O_SH2:O_B3]    # (1, 256)  b2*s2 + t2
    b3 = aux_ref[:, O_B3:AUX_W]     # (1, 128)  fc3 bias (zero-padded)

    # fc1 over the 1024-wide feature block: bf16 x bf16 on the MXU, f32 accumulate.
    h1 = jnp.dot(x_ref[...], w1_ref[...], preferred_element_type=jnp.float32)
    # BN1 scale + 'amount' rank-1 correction + shift + ReLU, all f32 on the VPU
    # (v5e has no bf16 VALU path -> keep the epilogue f32).
    h1 = jnp.maximum(h1 * s1 + amt_ref[...] * w1a + sh1, 0.0)
    # fc2 -> BN2 scale/shift -> ReLU
    h2 = jnp.dot(h1.astype(jnp.bfloat16), w2_ref[...],
                 preferred_element_type=jnp.float32)
    h2 = jnp.maximum(h2 * s2 + sh2, 0.0)
    # fc3 -> padded (B, 128) logits, lane-dense store
    out_ref[...] = jnp.dot(h2.astype(jnp.bfloat16), w3_ref[...],
                           preferred_element_type=jnp.float32) + b3


def mlp_head(x_bf16, amount, head):
    vmem = lambda: pl.BlockSpec(memory_space=pltpu.MemorySpace.VMEM)
    # TODO(synk): at serving scale, hide the ~1.3 MiB weight DMA behind the upstream
    # embedding gather / masked-mean pool (cross-call semaphore-future prefetch, or
    # fuse the gathers into this pallas_call via PrefetchScalarGridSpec + pl.ANY
    # weights), and add grid=(B//TM,) with dimension_semantics=("parallel",) and
    # TM a multiple of 256 so both v7x TensorCores / the full MXU M are used.
    out_pad = pl.pallas_call(
        mlp_head_kernel,
        out_shape=jax.ShapeDtypeStruct((B, NUM_CLASSES_PAD), jnp.float32),
        in_specs=[vmem(), vmem(), vmem(), vmem(), vmem(), vmem()],
        out_specs=vmem(),
        compiler_params=pltpu.CompilerParams(vmem_limit_bytes=8 << 20),
    )(x_bf16, amount, head["w1"], head["w2"], head["w3"], head["aux"])
    return out_pad[:, :NUM_CLASSES]


# ----------------------------- parameter init (deterministic) -----------------------------
def init_params(key):
    ks = jax.random.split(key, 24)
    n = lambda k, shp, sc=0.02: (jax.random.normal(k, shp, jnp.float32) * sc)
    p = {}
    # TODO(synk): full DistilBertModel backbone is not translated; a deterministic
    # surrogate (token embedding + attention-masked mean pool -> 768-d "CLS") stands in.
    p["bert_tok_emb"] = n(ks[0], (BERT_VOCAB, BERT_DIM))
    p["cat_emb"] = [n(ks[1 + i], (CAT_VOCAB, EMB_DIM)) for i in range(N_CAT)]
    p["hier_emb"] = [n(ks[3 + i], (HIER_VOCAB, EMB_DIM)) for i in range(N_HIER)]
    # fc layers, weights stored (in, out)
    p["w1"] = n(ks[10], (D_IN, HID1)); p["b1"] = n(ks[11], (1, HID1))
    p["w2"] = n(ks[12], (HID1, HID2)); p["b2"] = n(ks[13], (1, HID2))
    p["w3"] = n(ks[14], (HID2, NUM_CLASSES)); p["b3"] = n(ks[15], (1, NUM_CLASSES))
    # batchnorm (eval mode) params: gamma, beta, running_mean, running_var
    p["bn1"] = (1.0 + n(ks[16], (1, HID1), 0.1), n(ks[17], (1, HID1), 0.1),
                n(ks[18], (1, HID1), 0.1), 1.0 + jnp.abs(n(ks[19], (1, HID1), 0.1)))
    p["bn2"] = (1.0 + n(ks[20], (1, HID2), 0.1), n(ks[21], (1, HID2), 0.1),
                n(ks[22], (1, HID2), 0.1), 1.0 + jnp.abs(n(ks[23], (1, HID2), 0.1)))
    return p


def fold_bn(gamma, beta, mean, var):
    scale = gamma / jnp.sqrt(var + BN_EPS)
    shift = beta - mean * scale
    return scale, shift


def prepare_head_params(p):
    """Done ONCE at parameter-prep time (never per forward):
       * BN folded to per-channel (scale, shift) applied in the f32 epilogue
         (weights stay UNscaled bf16 -> no compounding quantization error),
       * 'amount' row of w1 split off as an f32 rank-1 correction,
       * fc3 weight/bias padded to 128 output lanes,
       * all small f32 vectors packed into one (1, 2176) aux array."""
    s1, t1 = fold_bn(*p["bn1"])
    s2, t2 = fold_bn(*p["bn2"])
    sh1 = p["b1"] * s1 + t1                               # (1, 512)
    sh2 = p["b2"] * s2 + t2                               # (1, 256)
    w1_amt = (p["w1"][D_FEAT:] * s1).astype(jnp.float32)  # (1, 512), pre-scaled by s1
    w3_pad = jnp.zeros((HID2, NUM_CLASSES_PAD), jnp.float32).at[:, :NUM_CLASSES].set(p["w3"])
    b3_pad = jnp.zeros((1, NUM_CLASSES_PAD), jnp.float32).at[:, :NUM_CLASSES].set(p["b3"])
    aux = jnp.concatenate([s1, w1_amt, sh1, s2, sh2, b3_pad], axis=1).astype(jnp.float32)
    assert aux.shape == (1, AUX_W)
    return {
        "w1": p["w1"][:D_FEAT].astype(jnp.bfloat16),      # (1024, 512) bf16, unscaled
        "w2": p["w2"].astype(jnp.bfloat16),               # (512, 256)  bf16, unscaled
        "w3": w3_pad.astype(jnp.bfloat16),                # (256, 128)  bf16, zero-padded
        "aux": aux,                                       # (1, 2176)   f32 packed sides
        # unpacked copies kept only for the pure-JAX reference below
        "_s1": s1, "_w1_amt": w1_amt, "_sh1": sh1, "_s2": s2, "_sh2": sh2, "_b3": b3_pad,
    }


# ----------------------------- glue (plain JAX) + forward -----------------------------
def build_features(params, input_ids, attention_mask, cat_features, hier_features):
    # surrogate "bert_cls": masked mean of token embeddings (bert_dropout = identity in eval)
    tok = params["bert_tok_emb"][input_ids]                       # [B, SEQ, 768]
    m = attention_mask.astype(jnp.float32)[..., None]             # [B, SEQ, 1]
    bert_cls = (tok * m).sum(axis=1) / jnp.maximum(m.sum(axis=1), 1.0)   # [B, 768]
    cat_emb = jnp.concatenate(
        [params["cat_emb"][i][cat_features[:, i]] for i in range(N_CAT)], axis=1)     # [B, 64]
    hier_emb = jnp.concatenate(
        [params["hier_emb"][i][hier_features[:, i]] for i in range(N_HIER)], axis=1)  # [B, 192]
    return jnp.concatenate([bert_cls, cat_emb, hier_emb], axis=1)                      # [B, 1024]


@jax.jit
def forward(params, head, input_ids, attention_mask, cat_features, hier_features, amount):
    feat = build_features(params, input_ids, attention_mask, cat_features, hier_features)
    return mlp_head(feat.astype(jnp.bfloat16), amount.astype(jnp.float32), head)


def forward_ref(params, head, input_ids, attention_mask, cat_features, hier_features, amount):
    # pure-JAX reference using the SAME prepared (bf16 weights, f32 BN epilogue) params
    feat = build_features(params, input_ids, attention_mask, cat_features, hier_features)
    x = feat.astype(jnp.bfloat16)
    h1 = jnp.dot(x, head["w1"], preferred_element_type=jnp.float32)
    h1 = jnp.maximum(h1 * head["_s1"] + amount * head["_w1_amt"] + head["_sh1"], 0.0)
    h2 = jnp.dot(h1.astype(jnp.bfloat16), head["w2"], preferred_element_type=jnp.float32)
    h2 = jnp.maximum(h2 * head["_s2"] + head["_sh2"], 0.0)
    out = jnp.dot(h2.astype(jnp.bfloat16), head["w3"],
                  preferred_element_type=jnp.float32) + head["_b3"]
    return out[:, :NUM_CLASSES]


def forward_ref_f32(params, input_ids, attention_mask, cat_features, hier_features, amount):
    # full-precision reference of the ORIGINAL module formulation (fc -> BN -> relu)
    feat = build_features(params, input_ids, attention_mask, cat_features, hier_features)
    x = jnp.concatenate([feat, amount], axis=1)                   # [B, 1025]
    s1, t1 = fold_bn(*params["bn1"])
    s2, t2 = fold_bn(*params["bn2"])
    h1 = jnp.maximum((x @ params["w1"] + params["b1"]) * s1 + t1, 0.0)
    h2 = jnp.maximum((h1 @ params["w2"] + params["b2"]) * s2 + t2, 0.0)
    return h2 @ params["w3"] + params["b3"]


if __name__ == "__main__":
    key = jax.random.PRNGKey(0)
    kp, k1, k2, k3, k4, k5 = jax.random.split(key, 6)
    params = init_params(kp)
    head = prepare_head_params(params)   # one-time parameter prep (BN fold + bf16 cast + pack)

    input_ids = jax.random.randint(k1, (B, SEQ), 0, BERT_VOCAB, dtype=jnp.int32)
    attention_mask = (jax.random.uniform(k2, (B, SEQ)) > 0.2).astype(jnp.int32)
    cat_features = jax.random.randint(k3, (B, N_CAT), 0, CAT_VOCAB, dtype=jnp.int32)
    hier_features = jax.random.randint(k4, (B, N_HIER), 0, HIER_VOCAB, dtype=jnp.int32)
    amount = jax.random.uniform(k5, (B, 1), dtype=jnp.float32)

    logits = forward(params, head, input_ids, attention_mask, cat_features, hier_features, amount)
    logits = jax.block_until_ready(logits)
    assert logits.shape == (B, NUM_CLASSES)

    # tight check vs. a reference that uses the same bf16 / f32-epilogue prepared params
    ref = forward_ref(params, head, input_ids, attention_mask, cat_features, hier_features, amount)
    assert jnp.allclose(logits, ref, atol=2e-3, rtol=2e-3)

    # looser sanity check vs. the full-precision original-formulation reference
    ref32 = forward_ref_f32(params, input_ids, attention_mask, cat_features, hier_features, amount)
    assert jnp.allclose(logits, ref32, atol=5e-3, rtol=5e-2)

    print("KERNEL_OK")
</pallas_src>

<mosaic_0001>
module attributes {stable_mosaic.version = 11 : i64} {
  func.func @mlp_head_kernel(%arg0: memref<8x1024xbf16, #tpu.memory_space<vmem>>, %arg1: memref<8x1xf32, #tpu.memory_space<vmem>>, %arg2: memref<1024x512xbf16, #tpu.memory_space<vmem>>, %arg3: memref<512x256xbf16, #tpu.memory_space<vmem>>, %arg4: memref<256x128xbf16, #tpu.memory_space<vmem>>, %arg5: memref<1x2176xf32, #tpu.memory_space<vmem>>, %arg6: memref<8x128xf32, #tpu.memory_space<vmem>>) attributes {dimension_semantics = [], scalar_prefetch = 0 : i64, scratch_operands = 0 : i64, tpu.core_type = #tpu.core_type<tc>} {
    %c0 = arith.constant 0 : index
    %c0_0 = arith.constant 0 : index
    %0 = vector.load %arg5[%c0, %c0_0] : memref<1x2176xf32, #tpu.memory_space<vmem>>, vector<1x512xf32>
    %c0_1 = arith.constant 0 : index
    %c512 = arith.constant 512 : index
    %1 = vector.load %arg5[%c0_1, %c512] : memref<1x2176xf32, #tpu.memory_space<vmem>>, vector<1x512xf32>
    %c0_2 = arith.constant 0 : index
    %c1024 = arith.constant 1024 : index
    %2 = vector.load %arg5[%c0_2, %c1024] : memref<1x2176xf32, #tpu.memory_space<vmem>>, vector<1x512xf32>
    %c0_3 = arith.constant 0 : index
    %c1536 = arith.constant 1536 : index
    %3 = vector.load %arg5[%c0_3, %c1536] : memref<1x2176xf32, #tpu.memory_space<vmem>>, vector<1x256xf32>
    %c0_4 = arith.constant 0 : index
    %c1792 = arith.constant 1792 : index
    %4 = vector.load %arg5[%c0_4, %c1792] : memref<1x2176xf32, #tpu.memory_space<vmem>>, vector<1x256xf32>
    %c0_5 = arith.constant 0 : index
    %c2048 = arith.constant 2048 : index
    %5 = vector.load %arg5[%c0_5, %c2048] : memref<1x2176xf32, #tpu.memory_space<vmem>>, vector<1x128xf32>
    %c0_6 = arith.constant 0 : index
    %c0_7 = arith.constant 0 : index
    %6 = vector.load %arg0[%c0_6, %c0_7] : memref<8x1024xbf16, #tpu.memory_space<vmem>>, vector<8x1024xbf16>
    %c0_8 = arith.constant 0 : index
    %c0_9 = arith.constant 0 : index
    %7 = vector.load %arg2[%c0_8, %c0_9] : memref<1024x512xbf16, #tpu.memory_space<vmem>>, vector<1024x512xbf16>
    %cst = arith.constant dense<0.000000e+00> : vector<8x512xf32>
    %8 = tpu.matmul %6, %7, %cst {dimension_numbers = #tpu.dot_dimension_numbers<[1], [0], [0], [1], [0, 0, 1, 1], [], []>} : vector<8x1024xbf16>, vector<1024x512xbf16>, vector<8x512xf32> -> vector<8x512xf32>
    %9 = vector.broadcast %0 : vector<1x512xf32> to vector<8x512xf32>
    %10 = arith.mulf %8, %9 : vector<8x512xf32>
    %c0_10 = arith.constant 0 : index
    %c0_11 = arith.constant 0 : index
    %11 = vector.load %arg1[%c0_10, %c0_11] : memref<8x1xf32, #tpu.memory_space<vmem>>, vector<8x1xf32>
    %12 = vector.broadcast %11 : vector<8x1xf32> to vector<8x512xf32>
    %13 = vector.broadcast %1 : vector<1x512xf32> to vector<8x512xf32>
    %14 = arith.mulf %12, %13 : vector<8x512xf32>
    %15 = arith.addf %10, %14 : vector<8x512xf32>
    %16 = vector.broadcast %2 : vector<1x512xf32> to vector<8x512xf32>
    %17 = arith.addf %15, %16 : vector<8x512xf32>
    %cst_12 = arith.constant 0.000000e+00 : f32
    %18 = vector.broadcast %cst_12 : f32 to vector<8x512xf32>
    %19 = arith.maximumf %17, %18 : vector<8x512xf32>
    %20 = arith.truncf %19 : vector<8x512xf32> to vector<8x512xbf16>
    %c0_13 = arith.constant 0 : index
    %c0_14 = arith.constant 0 : index
    %21 = vector.load %arg3[%c0_13, %c0_14] : memref<512x256xbf16, #tpu.memory_space<vmem>>, vector<512x256xbf16>
    %cst_15 = arith.constant dense<0.000000e+00> : vector<8x256xf32>
    %22 = tpu.matmul %20, %21, %cst_15 {dimension_numbers = #tpu.dot_dimension_numbers<[1], [0], [0], [1], [0, 0, 1, 1], [], []>} : vector<8x512xbf16>, vector<512x256xbf16>, vector<8x256xf32> -> vector<8x256xf32>
    %23 = vector.broadcast %3 : vector<1x256xf32> to vector<8x256xf32>
    %24 = arith.mulf %22, %23 : vector<8x256xf32>
    %25 = vector.broadcast %4 : vector<1x256xf32> to vector<8x256xf32>
    %26 = arith.addf %24, %25 : vector<8x256xf32>
    %cst_16 = arith.constant 0.000000e+00 : f32
    %27 = vector.broadcast %cst_16 : f32 to vector<8x256xf32>
    %28 = arith.maximumf %26, %27 : vector<8x256xf32>
    %29 = arith.truncf %28 : vector<8x256xf32> to vector<8x256xbf16>
    %c0_17 = arith.constant 0 : index
    %c0_18 = arith.constant 0 : index
    %30 = vector.load %arg4[%c0_17, %c0_18] : memref<256x128xbf16, #tpu.memory_space<vmem>>, vector<256x128xbf16>
    %cst_19 = arith.constant dense<0.000000e+00> : vector<8x128xf32>
    %31 = tpu.matmul %29, %30, %cst_19 {dimension_numbers = #tpu.dot_dimension_numbers<[1], [0], [0], [1], [0, 0, 1, 1], [], []>} : vector<8x256xbf16>, vector<256x128xbf16>, vector<8x128xf32> -> vector<8x128xf32>
    %32 = vector.broadcast %5 : vector<1x128xf32> to vector<8x128xf32>
    %33 = arith.addf %31, %32 : vector<8x128xf32>
    %c0_20 = arith.constant 0 : index
    %c0_21 = arith.constant 0 : index
    %34 = vector.load %arg6[%c0_20, %c0_21] : memref<8x128xf32, #tpu.memory_space<vmem>>, vector<8x128xf32>
    tpu.vector_store %arg6[%c0_20, %c0_21], %33 {strides = array<i32>} : memref<8x128xf32, #tpu.memory_space<vmem>>, vector<8x128xf32>,
    return
  }
}

</mosaic_0001>

<llo_original>
// kernel: forward.1
$region0: #{forward.1}
  #allocation0 [shape = 'u32[]', space=smem, size = 0x4, offset = 0x4, fixed_abs, tag = 'smem constant byte address 0x4 - core index']
  #allocation1 [shape = 'u32[144,128]{1,0:T(1,128)}', space=vmem, size = 0x12000, scoped, tag = 'internal scratch']
  %s0 = inlined_call_operand.vmem [shape: bf16[8,1024], index: 0, kind: input, shape index: {}]
  %s1 = inlined_call_operand.vmem [shape: f32[8,1], index: 1, kind: input, shape index: {}]
  %s2 = inlined_call_operand.vmem [shape: bf16[1024,512], index: 2, kind: input, shape index: {}]
  %s3 = inlined_call_operand.vmem [shape: bf16[512,256], index: 3, kind: input, shape index: {}]
  %s4 = inlined_call_operand.vmem [shape: bf16[256,128], index: 4, kind: input, shape index: {}]
  %s5 = inlined_call_operand.vmem [shape: f32[1,2176], index: 5, kind: input, shape index: {}]
  %s6 = inlined_call_operand.hbm [shape: f32[8,128], index: 6, kind: output, shape index: {}]
  %s7 = sld [smem:[#allocation0]]
  $region34: #{forward.1} parent=0
    _
  %s9 = ssub.s32 1, %s7
  %s10 = scalar_select 0, %s9, %s7
  $region1: #{forward.1} parent=0
    #allocation2 [shape = 'u8[4096]{0}', space=vmem, size = 0x1000, scoped, tag = 'output window, operand 0, single buffered']
    #allocation3 [shape = 's32[1]{0}', space=sflag, size = 0x4, scoped, tag = 'scoped memory for forward.1']
    %11 = vsyncpa [#allocation3], 0
    // Predicated region
    $region2: #{forward.1} parent=1 // pred_check
      _
    $region3: #{forward.1} parent=1 // pred_check_branch
      %13 = sbr.rel (0) target = $region5
    $region4: #{forward.1} parent=1 // pred_region
      _
    $region5: #{forward.1} parent=1 // pred_fallthru
      _
    // Predicated region
    $region6: #{forward.1} parent=1 // pred_check
      _
    $region7: #{forward.1} parent=1 // pred_check_branch
      %15 = sbr.rel (0) target = $region9
    $region8: #{forward.1} parent=1 // pred_region
      _
    $region9: #{forward.1} parent=1 // pred_fallthru
      _
    // Predicated region
    $region10: #{forward.1} parent=1 // pred_check
      _
    $region11: #{forward.1} parent=1 // pred_check_branch
      %17 = sbr.rel (0) target = $region13
    $region12: #{forward.1} parent=1 // pred_region
      _
    $region13: #{forward.1} parent=1 // pred_fallthru
      _
    // Predicated region
    $region14: #{forward.1} parent=1 // pred_check
      _
    $region15: #{forward.1} parent=1 // pred_check_branch
      %19 = sbr.rel (0) target = $region17
    $region16: #{forward.1} parent=1 // pred_region
      _
    $region17: #{forward.1} parent=1 // pred_fallthru
      _
    // Predicated region
    $region18: #{forward.1} parent=1 // pred_check
      _
    $region19: #{forward.1} parent=1 // pred_check_branch
      %21 = sbr.rel (0) target = $region21
    $region20: #{forward.1} parent=1 // pred_region
      _
    $region21: #{forward.1} parent=1 // pred_fallthru
      _
    // Predicated region
    $region22: #{forward.1} parent=1 // pred_check
      _
    $region23: #{forward.1} parent=1 // pred_check_branch
      %23 = sbr.rel (0) target = $region25
    $region24: #{forward.1} parent=1 // pred_region
      _
    $region25: #{forward.1} parent=1 // pred_fallthru
      _
    %v25 = vld [vmem:[%s5] sm:$0xf]
    %v26 = vld [vmem:[%s5 + $0x4] sm:$0xf]
    %v27 = vld [vmem:[%s5 + $0x8] sm:$0xf]
    %v28 = vld [vmem:[%s5 + $0xc] sm:$0x3]
    %v29 = vld [vmem:[%s5 + $0xe] sm:$0x3]
    %v30 = vld [vmem:[%s5 + $0x10] sm:$0x1]
    %v31 = vld [vmem:[%s0] sm:$0xff]
    %v32 = vld [vmem:[%s0 + $0x8] sm:$0xff]
    %v33 = vld [vmem:[%s0 + $0x10] sm:$0xff]
    %v34 = vld [vmem:[%s0 + $0x18] sm:$0xff]
    %v35 = vld [vmem:[%s2] sm:$0xff]
    %v36 = vld [vmem:[%s2 + $0x8] sm:$0xff]
    %v37 = vld [vmem:[%s2 + $0x10] sm:$0xff]
    %v38 = vld [vmem:[%s2 + $0x18] sm:$0xff]
    %v39 = vld [vmem:[%s2 + $0x20] sm:$0xff]
    %v40 = vld [vmem:[%s2 + $0x28] sm:$0xff]
    %v41 = vld [vmem:[%s2 + $0x30] sm:$0xff]
    %v42 = vld [vmem:[%s2 + $0x38] sm:$0xff]
    %v43 = vld [vmem:[%s2 + $0x40] sm:$0xff]
    %v44 = vld [vmem:[%s2 + $0x48] sm:$0xff]
    %v45 = vld [vmem:[%s2 + $0x50] sm:$0xff]
    %v46 = vld [vmem:[%s2 + $0x58] sm:$0xff]
    %v47 = vld [vmem:[%s2 + $0x60] sm:$0xff]
    %v48 = vld [vmem:[%s2 + $0x68] sm:$0xff]
    %v49 = vld [vmem:[%s2 + $0x70] sm:$0xff]
    %v50 = vld [vmem:[%s2 + $0x78] sm:$0xff]
    %v51 = vld [vmem:[%s2 + $0x80] sm:$0xff]
    %v52 = vld [vmem:[%s2 + $0x88] sm:$0xff]
    %v53 = vld [vmem:[%s2 + $0x90] sm:$0xff]
    %v54 = vld [vmem:[%s2 + $0x98] sm:$0xff]
    %v55 = vld [vmem:[%s2 + $0xa0] sm:$0xff]
    %v56 = vld [vmem:[%s2 + $0xa8] sm:$0xff]
    %v57 = vld [vmem:[%s2 + $0xb0] sm:$0xff]
    %v58 = vld [vmem:[%s2 + $0xb8] sm:$0xff]
    %v59 = vld [vmem:[%s2 + $0xc0] sm:$0xff]
    %v60 = vld [vmem:[%s2 + $0xc8] sm:$0xff]
    %v61 = vld [vmem:[%s2 + $0xd0] sm:$0xff]
    %v62 = vld [vmem:[%s2 + $0xd8] sm:$0xff]
    %v63 = vld [vmem:[%s2 + $0xe0] sm:$0xff]
    %v64 = vld [vmem:[%s2 + $0xe8] sm:$0xff]
    %v65 = vld [vmem:[%s2 + $0xf0] sm:$0xff]
    %v66 = vld [vmem:[%s2 + $0xf8] sm:$0xff]
    %v67 = vld [vmem:[%s2 + $0x100] sm:$0xff]
    %v68 = vld [vmem:[%s2 + $0x108] sm:$0xff]
    %v69 = vld [vmem:[%s2 + $0x110] sm:$0xff]
    %v70 = vld [vmem:[%s2 + $0x118] sm:$0xff]
    %v71 = vld [vmem:[%s2 + $0x120] sm:$0xff]
    %v72 = vld [vmem:[%s2 + $0x128] sm:$0xff]
    %v73 = vld [vmem:[%s2 + $0x130] sm:$0xff]
    %v74 = vld [vmem:[%s2 + $0x138] sm:$0xff]
    %v75 = vld [vmem:[%s2 + $0x140] sm:$0xff]
    %v76 = vld [vmem:[%s2 + $0x148] sm:$0xff]
    %v77 = vld [vmem:[%s2 + $0x150] sm:$0xff]
    %v78 = vld [vmem:[%s2 + $0x158] sm:$0xff]
    %v79 = vld [vmem:[%s2 + $0x160] sm:$0xff]
    %v80 = vld [vmem:[%s2 + $0x168] sm:$0xff]
    %v81 = vld [vmem:[%s2 + $0x170] sm:$0xff]
    %v82 = vld [vmem:[%s2 + $0x178] sm:$0xff]
    %v83 = vld [vmem:[%s2 + $0x180] sm:$0xff]
    %v84 = vld [vmem:[%s2 + $0x188] sm:$0xff]
    %v85 = vld [vmem:[%s2 + $0x190] sm:$0xff]
    %v86 = vld [vmem:[%s2 + $0x198] sm:$0xff]
    %v87 = vld [vmem:[%s2 + $0x1a0] sm:$0xff]
    %v88 = vld [vmem:[%s2 + $0x1a8] sm:$0xff]
    %v89 = vld [vmem:[%s2 + $0x1b0] sm:$0xff]
    %v90 = vld [vmem:[%s2 + $0x1b8] sm:$0xff]
    %v91 = vld [vmem:[%s2 + $0x1c0] sm:$0xff]
    %v92 = vld [vmem:[%s2 + $0x1c8] sm:$0xff]
    %v93 = vld [vmem:[%s2 + $0x1d0] sm:$0xff]
    %v94 = vld [vmem:[%s2 + $0x1d8] sm:$0xff]
    %v95 = vld [vmem:[%s2 + $0x1e0] sm:$0xff]
    %v96 = vld [vmem:[%s2 + $0x1e8] sm:$0xff]
    %v97 = vld [vmem:[%s2 + $0x1f0] sm:$0xff]
    %v98 = vld [vmem:[%s2 + $0x1f8] sm:$0xff]
    %v99 = vld [vmem:[%s2 + $0x200] sm:$0xff]
    %v100 = vld [vmem:[%s2 + $0x208] sm:$0xff]
    %v101 = vld [vmem:[%s2 + $0x210] sm:$0xff]
    %v102 = vld [vmem:[%s2 + $0x218] sm:$0xff]
    %v103 = vld [vmem:[%s2 + $0x220] sm:$0xff]
    %v104 = vld [vmem:[%s2 + $0x228] sm:$0xff]
    %v105 = vld [vmem:[%s2 + $0x230] sm:$0xff]
    %v106 = vld [vmem:[%s2 + $0x238] sm:$0xff]
    %v107 = vld [vmem:[%s2 + $0x240] sm:$0xff]
    %v108 = vld [vmem:[%s2 + $0x248] sm:$0xff]
    %v109 = vld [vmem:[%s2 + $0x250] sm:$0xff]
    %v110 = vld [vmem:[%s2 + $0x258] sm:$0xff]
    %v111 = vld [vmem:[%s2 + $0x260] sm:$0xff]
    %v112 = vld [vmem:[%s2 + $0x268] sm:$0xff]
    %v113 = vld [vmem:[%s2 + $0x270] sm:$0xff]
    %v114 = vld [vmem:[%s2 + $0x278] sm:$0xff]
    %v115 = vld [vmem:[%s2 + $0x280] sm:$0xff]
    %v116 = vld [vmem:[%s2 + $0x288] sm:$0xff]
    %v117 = vld [vmem:[%s2 + $0x290] sm:$0xff]
    %v118 = vld [vmem:[%s2 + $0x298] sm:$0xff]
    %v119 = vld [vmem:[%s2 + $0x2a0] sm:$0xff]
    %v120 = vld [vmem:[%s2 + $0x2a8] sm:$0xff]
    %v121 = vld [vmem:[%s2 + $0x2b0] sm:$0xff]
    %v122 = vld [vmem:[%s2 + $0x2b8] sm:$0xff]
    %v123 = vld [vmem:[%s2 + $0x2c0] sm:$0xff]
    %v124 = vld [vmem:[%s2 + $0x2c8] sm:$0xff]
    %v125 = vld [vmem:[%s2 + $0x2d0] sm:$0xff]
    %v126 = vld [vmem:[%s2 + $0x2d8] sm:$0xff]
    %v127 = vld [vmem:[%s2 + $0x2e0] sm:$0xff]
    %v128 = vld [vmem:[%s2 + $0x2e8] sm:$0xff]
    %v129 = vld [vmem:[%s2 + $0x2f0] sm:$0xff]
    %v130 = vld [vmem:[%s2 + $0x2f8] sm:$0xff]
    %v131 = vld [vmem:[%s2 + $0x300] sm:$0xff]
    %v132 = vld [vmem:[%s2 + $0x308] sm:$0xff]
    %v133 = vld [vmem:[%s2 + $0x310] sm:$0xff]
    %v134 = vld [vmem:[%s2 + $0x318] sm:$0xff]
    %v135 = vld [vmem:[%s2 + $0x320] sm:$0xff]
    %v136 = vld [vmem:[%s2 + $0x328] sm:$0xff]
    %v137 = vld [vmem:[%s2 + $0x330] sm:$0xff]
    %v138 = vld [vmem:[%s2 + $0x338] sm:$0xff]
    %v139 = vld [vmem:[%s2 + $0x340] sm:$0xff]
    %v140 = vld [vmem:[%s2 + $0x348] sm:$0xff]
    %v141 = vld [vmem:[%s2 + $0x350] sm:$0xff]
    %v142 = vld [vmem:[%s2 + $0x358] sm:$0xff]
    %v143 = vld [vmem:[%s2 + $0x360] sm:$0xff]
    %v144 = vld [vmem:[%s2 + $0x368] sm:$0xff]
    %v145 = vld [vmem:[%s2 + $0x370] sm:$0xff]
    %v146 = vld [vmem:[%s2 + $0x378] sm:$0xff]
    %v147 = vld [vmem:[%s2 + $0x380] sm:$0xff]
    %v148 = vld [vmem:[%s2 + $0x388] sm:$0xff]
    %v149 = vld [vmem:[%s2 + $0x390] sm:$0xff]
    %v150 = vld [vmem:[%s2 + $0x398] sm:$0xff]
    %v151 = vld [vmem:[%s2 + $0x3a0] sm:$0xff]
    %v152 = vld [vmem:[%s2 + $0x3a8] sm:$0xff]
    %v153 = vld [vmem:[%s2 + $0x3b0] sm:$0xff]
    %v154 = vld [vmem:[%s2 + $0x3b8] sm:$0xff]
    %v155 = vld [vmem:[%s2 + $0x3c0] sm:$0xff]
    %v156 = vld [vmem:[%s2 + $0x3c8] sm:$0xff]
    %v157 = vld [vmem:[%s2 + $0x3d0] sm:$0xff]
    %v158 = vld [vmem:[%s2 + $0x3d8] sm:$0xff]
    %v159 = vld [vmem:[%s2 + $0x3e0] sm:$0xff]
    %v160 = vld [vmem:[%s2 + $0x3e8] sm:$0xff]
    %v161 = vld [vmem:[%s2 + $0x3f0] sm:$0xff]
    %v162 = vld [vmem:[%s2 + $0x3f8] sm:$0xff]
    %v163 = vld [vmem:[%s2 + $0x400] sm:$0xff]
    %v164 = vld [vmem:[%s2 + $0x408] sm:$0xff]
    %v165 = vld [vmem:[%s2 + $0x410] sm:$0xff]
    %v166 = vld [vmem:[%s2 + $0x418] sm:$0xff]
    %v167 = vld [vmem:[%s2 + $0x420] sm:$0xff]
    %v168 = vld [vmem:[%s2 + $0x428] sm:$0xff]
    %v169 = vld [vmem:[%s2 + $0x430] sm:$0xff]
    %v170 = vld [vmem:[%s2 + $0x438] sm:$0xff]
    %v171 = vld [vmem:[%s2 + $0x440] sm:$0xff]
    %v172 = vld [vmem:[%s2 + $0x448] sm:$0xff]
    %v173 = vld [vmem:[%s2 + $0x450] sm:$0xff]
    %v174 = vld [vmem:[%s2 + $0x458] sm:$0xff]
    %v175 = vld [vmem:[%s2 + $0x460] sm:$0xff]
    %v176 = vld [vmem:[%s2 + $0x468] sm:$0xff]
    %v177 = vld [vmem:[%s2 + $0x470] sm:$0xff]
    %v178 = vld [vmem:[%s2 + $0x478] sm:$0xff]
    %v179 = vld [vmem:[%s2 + $0x480] sm:$0xff]
    %v180 = vld [vmem:[%s2 + $0x488] sm:$0xff]
    %v181 = vld [vmem:[%s2 + $0x490] sm:$0xff]
    %v182 = vld [vmem:[%s2 + $0x498] sm:$0xff]
    %v183 = vld [vmem:[%s2 + $0x4a0] sm:$0xff]
    %v184 = vld [vmem:[%s2 + $0x4a8] sm:$0xff]
    %v185 = vld [vmem:[%s2 + $0x4b0] sm:$0xff]
    %v186 = vld [vmem:[%s2 + $0x4b8] sm:$0xff]
    %v187 = vld [vmem:[%s2 + $0x4c0] sm:$0xff]
    %v188 = vld [vmem:[%s2 + $0x4c8] sm:$0xff]
    %v189 = vld [vmem:[%s2 + $0x4d0] sm:$0xff]
    %v190 = vld [vmem:[%s2 + $0x4d8] sm:$0xff]
    %v191 = vld [vmem:[%s2 + $0x4e0] sm:$0xff]
    %v192 = vld [vmem:[%s2 + $0x4e8] sm:$0xff]
    %v193 = vld [vmem:[%s2 + $0x4f0] sm:$0xff]
    %v194 = vld [vmem:[%s2 + $0x4f8] sm:$0xff]
    %v195 = vld [vmem:[%s2 + $0x500] sm:$0xff]
    %v196 = vld [vmem:[%s2 + $0x508] sm:$0xff]
    %v197 = vld [vmem:[%s2 + $0x510] sm:$0xff]
    %v198 = vld [vmem:[%s2 + $0x518] sm:$0xff]
    %v199 = vld [vmem:[%s2 + $0x520] sm:$0xff]
    %v200 = vld [vmem:[%s2 + $0x528] sm:$0xff]
    %v201 = vld [vmem:[%s2 + $0x530] sm:$0xff]
    %v202 = vld [vmem:[%s2 + $0x538] sm:$0xff]
    %v203 = vld [vmem:[%s2 + $0x540] sm:$0xff]
    %v204 = vld [vmem:[%s2 + $0x548] sm:$0xff]
    %v205 = vld [vmem:[%s2 + $0x550] sm:$0xff]
    %v206 = vld [vmem:[%s2 + $0x558] sm:$0xff]
    %v207 = vld [vmem:[%s2 + $0x560] sm:$0xff]
    %v208 = vld [vmem:[%s2 + $0x568] sm:$0xff]
    %v209 = vld [vmem:[%s2 + $0x570] sm:$0xff]
    %v210 = vld [vmem:[%s2 + $0x578] sm:$0xff]
    %v211 = vld [vmem:[%s2 + $0x580] sm:$0xff]
    %v212 = vld [vmem:[%s2 + $0x588] sm:$0xff]
    %v213 = vld [vmem:[%s2 + $0x590] sm:$0xff]
    %v214 = vld [vmem:[%s2 + $0x598] sm:$0xff]
    %v215 = vld [vmem:[%s2 + $0x5a0] sm:$0xff]
    %v216 = vld [vmem:[%s2 + $0x5a8] sm:$0xff]
    %v217 = vld [vmem:[%s2 + $0x5b0] sm:$0xff]
    %v218 = vld [vmem:[%s2 + $0x5b8] sm:$0xff]
    %v219 = vld [vmem:[%s2 + $0x5c0] sm:$0xff]
    %v220 = vld [vmem:[%s2 + $0x5c8] sm:$0xff]
    %v221 = vld [vmem:[%s2 + $0x5d0] sm:$0xff]
    %v222 = vld [vmem:[%s2 + $0x5d8] sm:$0xff]
    %v223 = vld [vmem:[%s2 + $0x5e0] sm:$0xff]
    %v224 = vld [vmem:[%s2 + $0x5e8] sm:$0xff]
    %v225 = vld [vmem:[%s2 + $0x5f0] sm:$0xff]
    %v226 = vld [vmem:[%s2 + $0x5f8] sm:$0xff]
    %v227 = vld [vmem:[%s2 + $0x600] sm:$0xff]
    %v228 = vld [vmem:[%s2 + $0x608] sm:$0xff]
    %v229 = vld [vmem:[%s2 + $0x610] sm:$0xff]
    %v230 = vld [vmem:[%s2 + $0x618] sm:$0xff]
    %v231 = vld [vmem:[%s2 + $0x620] sm:$0xff]
    %v232 = vld [vmem:[%s2 + $0x628] sm:$0xff]
    %v233 = vld [vmem:[%s2 + $0x630] sm:$0xff]
    %v234 = vld [vmem:[%s2 + $0x638] sm:$0xff]
    %v235 = vld [vmem:[%s2 + $0x640] sm:$0xff]
    %v236 = vld [vmem:[%s2 + $0x648] sm:$0xff]
    %v237 = vld [vmem:[%s2 + $0x650] sm:$0xff]
    %v238 = vld [vmem:[%s2 + $0x658] sm:$0xff]
    %v239 = vld [vmem:[%s2 + $0x660] sm:$0xff]
    %v240 = vld [vmem:[%s2 + $0x668] sm:$0xff]
    %v241 = vld [vmem:[%s2 + $0x670] sm:$0xff]
    %v242 = vld [vmem:[%s2 + $0x678] sm:$0xff]
    %v243 = vld [vmem:[%s2 + $0x680] sm:$0xff]
    %v244 = vld [vmem:[%s2 + $0x688] sm:$0xff]
    %v245 = vld [vmem:[%s2 + $0x690] sm:$0xff]
    %v246 = vld [vmem:[%s2 + $0x698] sm:$0xff]
    %v247 = vld [vmem:[%s2 + $0x6a0] sm:$0xff]
    %v248 = vld [vmem:[%s2 + $0x6a8] sm:$0xff]
    %v249 = vld [vmem:[%s2 + $0x6b0] sm:$0xff]
    %v250 = vld [vmem:[%s2 + $0x6b8] sm:$0xff]
    %v251 = vld [vmem:[%s2 + $0x6c0] sm:$0xff]
    %v252 = vld [vmem:[%s2 + $0x6c8] sm:$0xff]
    %v253 = vld [vmem:[%s2 + $0x6d0] sm:$0xff]
    %v254 = vld [vmem:[%s2 + $0x6d8] sm:$0xff]
    %v255 = vld [vmem:[%s2 + $0x6e0] sm:$0xff]
    %v256 = vld [vmem:[%s2 + $0x6e8] sm:$0xff]
    %v257 = vld [vmem:[%s2 + $0x6f0] sm:$0xff]
    %v258 = vld [vmem:[%s2 + $0x6f8] sm:$0xff]
    %v259 = vld [vmem:[%s2 + $0x700] sm:$0xff]
    %v260 = vld [vmem:[%s2 + $0x708] sm:$0xff]
    %v261 = vld [vmem:[%s2 + $0x710] sm:$0xff]
    %v262 = vld [vmem:[%s2 + $0x718] sm:$0xff]
    %v263 = vld [vmem:[%s2 + $0x720] sm:$0xff]
    %v264 = vld [vmem:[%s2 + $0x728] sm:$0xff]
    %v265 = vld [vmem:[%s2 + $0x730] sm:$0xff]
    %v266 = vld [vmem:[%s2 + $0x738] sm:$0xff]
    %v267 = vld [vmem:[%s2 + $0x740] sm:$0xff]
    %v268 = vld [vmem:[%s2 + $0x748] sm:$0xff]
    %v269 = vld [vmem:[%s2 + $0x750] sm:$0xff]
    %v270 = vld [vmem:[%s2 + $0x758] sm:$0xff]
    %v271 = vld [vmem:[%s2 + $0x760] sm:$0xff]
    %v272 = vld [vmem:[%s2 + $0x768] sm:$0xff]
    %v273 = vld [vmem:[%s2 + $0x770] sm:$0xff]
    %v274 = vld [vmem:[%s2 + $0x778] sm:$0xff]
    %v275 = vld [vmem:[%s2 + $0x780] sm:$0xff]
    %v276 = vld [vmem:[%s2 + $0x788] sm:$0xff]
    %v277 = vld [vmem:[%s2 + $0x790] sm:$0xff]
    %v278 = vld [vmem:[%s2 + $0x798] sm:$0xff]
    %v279 = vld [vmem:[%s2 + $0x7a0] sm:$0xff]
    %v280 = vld [vmem:[%s2 + $0x7a8] sm:$0xff]
    %v281 = vld [vmem:[%s2 + $0x7b0] sm:$0xff]
    %v282 = vld [vmem:[%s2 + $0x7b8] sm:$0xff]
    %v283 = vld [vmem:[%s2 + $0x7c0] sm:$0xff]
    %v284 = vld [vmem:[%s2 + $0x7c8] sm:$0xff]
    %v285 = vld [vmem:[%s2 + $0x7d0] sm:$0xff]
    %v286 = vld [vmem:[%s2 + $0x7d8] sm:$0xff]
    %v287 = vld [vmem:[%s2 + $0x7e0] sm:$0xff]
    %v288 = vld [vmem:[%s2 + $0x7e8] sm:$0xff]
    %v289 = vld [vmem:[%s2 + $0x7f0] sm:$0xff]
    %v290 = vld [vmem:[%s2 + $0x7f8] sm:$0xff]
    %v295 = vunpack.c.l.b16 %v31
    %v296 = vunpack.c.h.b16 %v31
    %v297 = vunpack.c.l.b16 %v32
    %v298 = vunpack.c.h.b16 %v32
    %v299 = vunpack.c.l.b16 %v33
    %v300 = vunpack.c.h.b16 %v33
    %v301 = vunpack.c.l.b16 %v34
    %v302 = vunpack.c.h.b16 %v34
    %v303 = vpack.c.b16 %v295, %v295
    %v304 = vpack.c.b16 %v296, %v296
    %v305 = vpack.c.b16 %v297, %v297
    %v306 = vpack.c.b16 %v298, %v298
    %v307 = vpack.c.b16 %v299, %v299
    %v308 = vpack.c.b16 %v300, %v300
    %v309 = vpack.c.b16 %v301, %v301
    %v310 = vpack.c.b16 %v302, %v302
    %v575 = vunpack.c.l.b16 %v35
    %v576 = vunpack.c.h.b16 %v35
    %v577 = vunpack.c.l.b16 %v36
    %v578 = vunpack.c.h.b16 %v36
    %v579 = vunpack.c.l.b16 %v37
    %v580 = vunpack.c.h.b16 %v37
    %v581 = vunpack.c.l.b16 %v38
    %v582 = vunpack.c.h.b16 %v38
    %v583 = vunpack.c.l.b16 %v39
    %v584 = vunpack.c.h.b16 %v39
    %v585 = vunpack.c.l.b16 %v40
    %v586 = vunpack.c.h.b16 %v40
    %v587 = vunpack.c.l.b16 %v41
    %v588 = vunpack.c.h.b16 %v41
    %v589 = vunpack.c.l.b16 %v42
    %v590 = vunpack.c.h.b16 %v42
    %v591 = vunpack.c.l.b16 %v43
    %v592 = vunpack.c.h.b16 %v43
    %v593 = vunpack.c.l.b16 %v44
    %v594 = vunpack.c.h.b16 %v44
    %v595 = vunpack.c.l.b16 %v45
    %v596 = vunpack.c.h.b16 %v45
    %v597 = vunpack.c.l.b16 %v46
    %v598 = vunpack.c.h.b16 %v46
    %v599 = vunpack.c.l.b16 %v47
    %v600 = vunpack.c.h.b16 %v47
    %v601 = vunpack.c.l.b16 %v48
    %v602 = vunpack.c.h.b16 %v48
    %v603 = vunpack.c.l.b16 %v49
    %v604 = vunpack.c.h.b16 %v49
    %v605 = vunpack.c.l.b16 %v50
    %v606 = vunpack.c.h.b16 %v50
    %v607 = vunpack.c.l.b16 %v51
    %v608 = vunpack.c.h.b16 %v51
    %v609 = vunpack.c.l.b16 %v52
    %v610 = vunpack.c.h.b16 %v52
    %v611 = vunpack.c.l.b16 %v53
    %v612 = vunpack.c.h.b16 %v53
    %v613 = vunpack.c.l.b16 %v54
    %v614 = vunpack.c.h.b16 %v54
    %v615 = vunpack.c.l.b16 %v55
    %v616 = vunpack.c.h.b16 %v55
    %v617 = vunpack.c.l.b16 %v56
    %v618 = vunpack.c.h.b16 %v56
    %v619 = vunpack.c.l.b16 %v57
    %v620 = vunpack.c.h.b16 %v57
    %v621 = vunpack.c.l.b16 %v58
    %v622 = vunpack.c.h.b16 %v58
    %v623 = vunpack.c.l.b16 %v59
    %v624 = vunpack.c.h.b16 %v59
    %v625 = vunpack.c.l.b16 %v60
    %v626 = vunpack.c.h.b16 %v60
    %v627 = vunpack.c.l.b16 %v61
    %v628 = vunpack.c.h.b16 %v61
    %v629 = vunpack.c.l.b16 %v62
    %v630 = vunpack.c.h.b16 %v62
    %v631 = vunpack.c.l.b16 %v63
    %v632 = vunpack.c.h.b16 %v63
    %v633 = vunpack.c.l.b16 %v64
    %v634 = vunpack.c.h.b16 %v64
    %v635 = vunpack.c.l.b16 %v65
    %v636 = vunpack.c.h.b16 %v65
    %v637 = vunpack.c.l.b16 %v66
    %v638 = vunpack.c.h.b16 %v66
    %v639 = vunpack.c.l.b16 %v67
    %v640 = vunpack.c.h.b16 %v67
    %v641 = vunpack.c.l.b16 %v68
    %v642 = vunpack.c.h.b16 %v68
    %v643 = vunpack.c.l.b16 %v69
    %v644 = vunpack.c.h.b16 %v69
    %v645 = vunpack.c.l.b16 %v70
    %v646 = vunpack.c.h.b16 %v70
    %v647 = vunpack.c.l.b16 %v71
    %v648 = vunpack.c.h.b16 %v71
    %v649 = vunpack.c.l.b16 %v72
    %v650 = vunpack.c.h.b16 %v72
    %v651 = vunpack.c.l.b16 %v73
    %v652 = vunpack.c.h.b16 %v73
    %v653 = vunpack.c.l.b16 %v74
    %v654 = vunpack.c.h.b16 %v74
    %v655 = vunpack.c.l.b16 %v75
    %v656 = vunpack.c.h.b16 %v75
    %v657 = vunpack.c.l.b16 %v76
    %v658 = vunpack.c.h.b16 %v76
    %v659 = vunpack.c.l.b16 %v77
    %v660 = vunpack.c.h.b16 %v77
    %v661 = vunpack.c.l.b16 %v78
    %v662 = vunpack.c.h.b16 %v78
    %v663 = vunpack.c.l.b16 %v79
    %v664 = vunpack.c.h.b16 %v79
    %v665 = vunpack.c.l.b16 %v80
    %v666 = vunpack.c.h.b16 %v80
    %v667 = vunpack.c.l.b16 %v81
    %v668 = vunpack.c.h.b16 %v81
    %v669 = vunpack.c.l.b16 %v82
    %v670 = vunpack.c.h.b16 %v82
    %v671 = vunpack.c.l.b16 %v83
    %v672 = vunpack.c.h.b16 %v83
    %v673 = vunpack.c.l.b16 %v84
    %v674 = vunpack.c.h.b16 %v84
    %v675 = vunpack.c.l.b16 %v85
    %v676 = vunpack.c.h.b16 %v85
    %v677 = vunpack.c.l.b16 %v86
    %v678 = vunpack.c.h.b16 %v86
    %v679 = vunpack.c.l.b16 %v87
    %v680 = vunpack.c.h.b16 %v87
    %v681 = vunpack.c.l.b16 %v88
    %v682 = vunpack.c.h.b16 %v88
    %v683 = vunpack.c.l.b16 %v89
    %v684 = vunpack.c.h.b16 %v89
    %v685 = vunpack.c.l.b16 %v90
    %v686 = vunpack.c.h.b16 %v90
    %v687 = vunpack.c.l.b16 %v91
    %v688 = vunpack.c.h.b16 %v91
    %v689 = vunpack.c.l.b16 %v92
    %v690 = vunpack.c.h.b16 %v92
    %v691 = vunpack.c.l.b16 %v93
    %v692 = vunpack.c.h.b16 %v93
    %v693 = vunpack.c.l.b16 %v94
    %v694 = vunpack.c.h.b16 %v94
    %v695 = vunpack.c.l.b16 %v95
    %v696 = vunpack.c.h.b16 %v95
    %v697 = vunpack.c.l.b16 %v96
    %v698 = vunpack.c.h.b16 %v96
    %v699 = vunpack.c.l.b16 %v97
    %v700 = vunpack.c.h.b16 %v97
    %v701 = vunpack.c.l.b16 %v98
    %v702 = vunpack.c.h.b16 %v98
    %v703 = vunpack.c.l.b16 %v99
    %v704 = vunpack.c.h.b16 %v99
    %v705 = vunpack.c.l.b16 %v100
    %v706 = vunpack.c.h.b16 %v100
    %v707 = vunpack.c.l.b16 %v101
    %v708 = vunpack.c.h.b16 %v101
    %v709 = vunpack.c.l.b16 %v102
    %v710 = vunpack.c.h.b16 %v102
    %v711 = vunpack.c.l.b16 %v103
    %v712 = vunpack.c.h.b16 %v103
    %v713 = vunpack.c.l.b16 %v104
    %v714 = vunpack.c.h.b16 %v104
    %v715 = vunpack.c.l.b16 %v105
    %v716 = vunpack.c.h.b16 %v105
    %v717 = vunpack.c.l.b16 %v106
    %v718 = vunpack.c.h.b16 %v106
    %v719 = vunpack.c.l.b16 %v107
    %v720 = vunpack.c.h.b16 %v107
    %v721 = vunpack.c.l.b16 %v108
    %v722 = vunpack.c.h.b16 %v108
    %v723 = vunpack.c.l.b16 %v109
    %v724 = vunpack.c.h.b16 %v109
    %v725 = vunpack.c.l.b16 %v110
    %v726 = vunpack.c.h.b16 %v110
    %v727 = vunpack.c.l.b16 %v111
    %v728 = vunpack.c.h.b16 %v111
    %v729 = vunpack.c.l.b16 %v112
    %v730 = vunpack.c.h.b16 %v112
    %v731 = vunpack.c.l.b16 %v113
    %v732 = vunpack.c.h.b16 %v113
    %v733 = vunpack.c.l.b16 %v114
    %v734 = vunpack.c.h.b16 %v114
    %v735 = vunpack.c.l.b16 %v115
    %v736 = vunpack.c.h.b16 %v115
    %v737 = vunpack.c.l.b16 %v116
    %v738 = vunpack.c.h.b16 %v116
    %v739 = vunpack.c.l.b16 %v117
    %v740 = vunpack.c.h.b16 %v117
    %v741 = vunpack.c.l.b16 %v118
    %v742 = vunpack.c.h.b16 %v118
    %v743 = vunpack.c.l.b16 %v119
    %v744 = vunpack.c.h.b16 %v119
    %v745 = vunpack.c.l.b16 %v120
    %v746 = vunpack.c.h.b16 %v120
    %v747 = vunpack.c.l.b16 %v121
    %v748 = vunpack.c.h.b16 %v121
    %v749 = vunpack.c.l.b16 %v122
    %v750 = vunpack.c.h.b16 %v122
    %v751 = vunpack.c.l.b16 %v123
    %v752 = vunpack.c.h.b16 %v123
    %v753 = vunpack.c.l.b16 %v124
    %v754 = vunpack.c.h.b16 %v124
    %v755 = vunpack.c.l.b16 %v125
    %v756 = vunpack.c.h.b16 %v125
    %v757 = vunpack.c.l.b16 %v126
    %v758 = vunpack.c.h.b16 %v126
    %v759 = vunpack.c.l.b16 %v127
    %v760 = vunpack.c.h.b16 %v127
    %v761 = vunpack.c.l.b16 %v128
    %v762 = vunpack.c.h.b16 %v128
    %v763 = vunpack.c.l.b16 %v129
    %v764 = vunpack.c.h.b16 %v129
    %v765 = vunpack.c.l.b16 %v130
    %v766 = vunpack.c.h.b16 %v130
    %v767 = vunpack.c.l.b16 %v131
    %v768 = vunpack.c.h.b16 %v131
    %v769 = vunpack.c.l.b16 %v132
    %v770 = vunpack.c.h.b16 %v132
    %v771 = vunpack.c.l.b16 %v133
    %v772 = vunpack.c.h.b16 %v133
    %v773 = vunpack.c.l.b16 %v134
    %v774 = vunpack.c.h.b16 %v134
    %v775 = vunpack.c.l.b16 %v135
    %v776 = vunpack.c.h.b16 %v135
    %v777 = vunpack.c.l.b16 %v136
    %v778 = vunpack.c.h.b16 %v136
    %v779 = vunpack.c.l.b16 %v137
    %v780 = vunpack.c.h.b16 %v137
    %v781 = vunpack.c.l.b16 %v138
    %v782 = vunpack.c.h.b16 %v138
    %v783 = vunpack.c.l.b16 %v139
    %v784 = vunpack.c.h.b16 %v139
    %v785 = vunpack.c.l.b16 %v140
    %v786 = vunpack.c.h.b16 %v140
    %v787 = vunpack.c.l.b16 %v141
    %v788 = vunpack.c.h.b16 %v141
    %v789 = vunpack.c.l.b16 %v142
    %v790 = vunpack.c.h.b16 %v142
    %v791 = vunpack.c.l.b16 %v143
    %v792 = vunpack.c.h.b16 %v143
    %v793 = vunpack.c.l.b16 %v144
    %v794 = vunpack.c.h.b16 %v144
    %v795 = vunpack.c.l.b16 %v145
    %v796 = vunpack.c.h.b16 %v145
    %v797 = vunpack.c.l.b16 %v146
    %v798 = vunpack.c.h.b16 %v146
    %v799 = vunpack.c.l.b16 %v147
    %v800 = vunpack.c.h.b16 %v147
    %v801 = vunpack.c.l.b16 %v148
    %v802 = vunpack.c.h.b16 %v148
    %v803 = vunpack.c.l.b16 %v149
    %v804 = vunpack.c.h.b16 %v149
    %v805 = vunpack.c.l.b16 %v150
    %v806 = vunpack.c.h.b16 %v150
    %v807 = vunpack.c.l.b16 %v151
    %v808 = vunpack.c.h.b16 %v151
    %v809 = vunpack.c.l.b16 %v152
    %v810 = vunpack.c.h.b16 %v152
    %v811 = vunpack.c.l.b16 %v153
    %v812 = vunpack.c.h.b16 %v153
    %v813 = vunpack.c.l.b16 %v154
    %v814 = vunpack.c.h.b16 %v154
    %v815 = vunpack.c.l.b16 %v155
    %v816 = vunpack.c.h.b16 %v155
    %v817 = vunpack.c.l.b16 %v156
    %v818 = vunpack.c.h.b16 %v156
    %v819 = vunpack.c.l.b16 %v157
    %v820 = vunpack.c.h.b16 %v157
    %v821 = vunpack.c.l.b16 %v158
    %v822 = vunpack.c.h.b16 %v158
    %v823 = vunpack.c.l.b16 %v159
    %v824 = vunpack.c.h.b16 %v159
    %v825 = vunpack.c.l.b16 %v160
    %v826 = vunpack.c.h.b16 %v160
    %v827 = vunpack.c.l.b16 %v161
    %v828 = vunpack.c.h.b16 %v161
    %v829 = vunpack.c.l.b16 %v162
    %v830 = vunpack.c.h.b16 %v162
    %v831 = vunpack.c.l.b16 %v163
    %v832 = vunpack.c.h.b16 %v163
    %v833 = vunpack.c.l.b16 %v164
    %v834 = vunpack.c.h.b16 %v164
    %v835 = vunpack.c.l.b16 %v165
    %v836 = vunpack.c.h.b16 %v165
    %v837 = vunpack.c.l.b16 %v166
    %v838 = vunpack.c.h.b16 %v166
    %v839 = vunpack.c.l.b16 %v167
    %v840 = vunpack.c.h.b16 %v167
    %v841 = vunpack.c.l.b16 %v168
    %v842 = vunpack.c.h.b16 %v168
    %v843 = vunpack.c.l.b16 %v169
    %v844 = vunpack.c.h.b16 %v169
    %v845 = vunpack.c.l.b16 %v170
    %v846 = vunpack.c.h.b16 %v170
    %v847 = vunpack.c.l.b16 %v171
    %v848 = vunpack.c.h.b16 %v171
    %v849 = vunpack.c.l.b16 %v172
    %v850 = vunpack.c.h.b16 %v172
    %v851 = vunpack.c.l.b16 %v173
    %v852 = vunpack.c.h.b16 %v173
    %v853 = vunpack.c.l.b16 %v174
    %v854 = vunpack.c.h.b16 %v174
    %v855 = vunpack.c.l.b16 %v175
    %v856 = vunpack.c.h.b16 %v175
    %v857 = vunpack.c.l.b16 %v176
    %v858 = vunpack.c.h.b16 %v176
    %v859 = vunpack.c.l.b16 %v177
    %v860 = vunpack.c.h.b16 %v177
    %v861 = vunpack.c.l.b16 %v178
    %v862 = vunpack.c.h.b16 %v178
    %v863 = vunpack.c.l.b16 %v179
    %v864 = vunpack.c.h.b16 %v179
    %v865 = vunpack.c.l.b16 %v180
    %v866 = vunpack.c.h.b16 %v180
    %v867 = vunpack.c.l.b16 %v181
    %v868 = vunpack.c.h.b16 %v181
    %v869 = vunpack.c.l.b16 %v182
    %v870 = vunpack.c.h.b16 %v182
    %v871 = vunpack.c.l.b16 %v183
    %v872 = vunpack.c.h.b16 %v183
    %v873 = vunpack.c.l.b16 %v184
    %v874 = vunpack.c.h.b16 %v184
    %v875 = vunpack.c.l.b16 %v185
    %v876 = vunpack.c.h.b16 %v185
    %v877 = vunpack.c.l.b16 %v186
    %v878 = vunpack.c.h.b16 %v186
    %v879 = vunpack.c.l.b16 %v187
    %v880 = vunpack.c.h.b16 %v187
    %v881 = vunpack.c.l.b16 %v188
    %v882 = vunpack.c.h.b16 %v188
    %v883 = vunpack.c.l.b16 %v189
    %v884 = vunpack.c.h.b16 %v189
    %v885 = vunpack.c.l.b16 %v190
    %v886 = vunpack.c.h.b16 %v190
    %v887 = vunpack.c.l.b16 %v191
    %v888 = vunpack.c.h.b16 %v191
    %v889 = vunpack.c.l.b16 %v192
    %v890 = vunpack.c.h.b16 %v192
    %v891 = vunpack.c.l.b16 %v193
    %v892 = vunpack.c.h.b16 %v193
    %v893 = vunpack.c.l.b16 %v194
    %v894 = vunpack.c.h.b16 %v194
    %v895 = vunpack.c.l.b16 %v195
    %v896 = vunpack.c.h.b16 %v195
    %v897 = vunpack.c.l.b16 %v196
    %v898 = vunpack.c.h.b16 %v196
    %v899 = vunpack.c.l.b16 %v197
    %v900 = vunpack.c.h.b16 %v197
    %v901 = vunpack.c.l.b16 %v198
    %v902 = vunpack.c.h.b16 %v198
    %v903 = vunpack.c.l.b16 %v199
    %v904 = vunpack.c.h.b16 %v199
    %v905 = vunpack.c.l.b16 %v200
    %v906 = vunpack.c.h.b16 %v200
    %v907 = vunpack.c.l.b16 %v201
    %v908 = vunpack.c.h.b16 %v201
    %v909 = vunpack.c.l.b16 %v202
    %v910 = vunpack.c.h.b16 %v202
    %v911 = vunpack.c.l.b16 %v203
    %v912 = vunpack.c.h.b16 %v203
    %v913 = vunpack.c.l.b16 %v204
    %v914 = vunpack.c.h.b16 %v204
    %v915 = vunpack.c.l.b16 %v205
    %v916 = vunpack.c.h.b16 %v205
    %v917 = vunpack.c.l.b16 %v206
    %v918 = vunpack.c.h.b16 %v206
    %v919 = vunpack.c.l.b16 %v207
    %v920 = vunpack.c.h.b16 %v207
    %v921 = vunpack.c.l.b16 %v208
    %v922 = vunpack.c.h.b16 %v208
    %v923 = vunpack.c.l.b16 %v209
    %v924 = vunpack.c.h.b16 %v209
    %v925 = vunpack.c.l.b16 %v210
    %v926 = vunpack.c.h.b16 %v210
    %v927 = vunpack.c.l.b16 %v211
    %v928 = vunpack.c.h.b16 %v211
    %v929 = vunpack.c.l.b16 %v212
    %v930 = vunpack.c.h.b16 %v212
    %v931 = vunpack.c.l.b16 %v213
    %v932 = vunpack.c.h.b16 %v213
    %v933 = vunpack.c.l.b16 %v214
    %v934 = vunpack.c.h.b16 %v214
    %v935 = vunpack.c.l.b16 %v215
    %v936 = vunpack.c.h.b16 %v215
    %v937 = vunpack.c.l.b16 %v216
    %v938 = vunpack.c.h.b16 %v216
    %v939 = vunpack.c.l.b16 %v217
    %v940 = vunpack.c.h.b16 %v217
    %v941 = vunpack.c.l.b16 %v218
    %v942 = vunpack.c.h.b16 %v218
    %v943 = vunpack.c.l.b16 %v219
    %v944 = vunpack.c.h.b16 %v219
    %v945 = vunpack.c.l.b16 %v220
    %v946 = vunpack.c.h.b16 %v220
    %v947 = vunpack.c.l.b16 %v221
    %v948 = vunpack.c.h.b16 %v221
    %v949 = vunpack.c.l.b16 %v222
    %v950 = vunpack.c.h.b16 %v222
    %v951 = vunpack.c.l.b16 %v223
    %v952 = vunpack.c.h.b16 %v223
    %v953 = vunpack.c.l.b16 %v224
    %v954 = vunpack.c.h.b16 %v224
    %v955 = vunpack.c.l.b16 %v225
    %v956 = vunpack.c.h.b16 %v225
    %v957 = vunpack.c.l.b16 %v226
    %v958 = vunpack.c.h.b16 %v226
    %v959 = vunpack.c.l.b16 %v227
    %v960 = vunpack.c.h.b16 %v227
    %v961 = vunpack.c.l.b16 %v228
    %v962 = vunpack.c.h.b16 %v228
    %v963 = vunpack.c.l.b16 %v229
    %v964 = vunpack.c.h.b16 %v229
    %v965 = vunpack.c.l.b16 %v230
    %v966 = vunpack.c.h.b16 %v230
    %v967 = vunpack.c.l.b16 %v231
    %v968 = vunpack.c.h.b16 %v231
    %v969 = vunpack.c.l.b16 %v232
    %v970 = vunpack.c.h.b16 %v232
    %v971 = vunpack.c.l.b16 %v233
    %v972 = vunpack.c.h.b16 %v233
    %v973 = vunpack.c.l.b16 %v234
    %v974 = vunpack.c.h.b16 %v234
    %v975 = vunpack.c.l.b16 %v235
    %v976 = vunpack.c.h.b16 %v235
    %v977 = vunpack.c.l.b16 %v236
    %v978 = vunpack.c.h.b16 %v236
    %v979 = vunpack.c.l.b16 %v237
    %v980 = vunpack.c.h.b16 %v237
    %v981 = vunpack.c.l.b16 %v238
    %v982 = vunpack.c.h.b16 %v238
    %v983 = vunpack.c.l.b16 %v239
    %v984 = vunpack.c.h.b16 %v239
    %v985 = vunpack.c.l.b16 %v240
    %v986 = vunpack.c.h.b16 %v240
    %v987 = vunpack.c.l.b16 %v241
    %v988 = vunpack.c.h.b16 %v241
    %v989 = vunpack.c.l.b16 %v242
    %v990 = vunpack.c.h.b16 %v242
    %v991 = vunpack.c.l.b16 %v243
    %v992 = vunpack.c.h.b16 %v243
    %v993 = vunpack.c.l.b16 %v244
    %v994 = vunpack.c.h.b16 %v244
    %v995 = vunpack.c.l.b16 %v245
    %v996 = vunpack.c.h.b16 %v245
    %v997 = vunpack.c.l.b16 %v246
    %v998 = vunpack.c.h.b16 %v246
    %v999 = vunpack.c.l.b16 %v247
    %v1000 = vunpack.c.h.b16 %v247
    %v1001 = vunpack.c.l.b16 %v248
    %v1002 = vunpack.c.h.b16 %v248
    %v1003 = vunpack.c.l.b16 %v249
    %v1004 = vunpack.c.h.b16 %v249
    %v1005 = vunpack.c.l.b16 %v250
    %v1006 = vunpack.c.h.b16 %v250
    %v1007 = vunpack.c.l.b16 %v251
    %v1008 = vunpack.c.h.b16 %v251
    %v1009 = vunpack.c.l.b16 %v252
    %v1010 = vunpack.c.h.b16 %v252
    %v1011 = vunpack.c.l.b16 %v253
    %v1012 = vunpack.c.h.b16 %v253
    %v1013 = vunpack.c.l.b16 %v254
    %v1014 = vunpack.c.h.b16 %v254
    %v1015 = vunpack.c.l.b16 %v255
    %v1016 = vunpack.c.h.b16 %v255
    %v1017 = vunpack.c.l.b16 %v256
    %v1018 = vunpack.c.h.b16 %v256
    %v1019 = vunpack.c.l.b16 %v257
    %v1020 = vunpack.c.h.b16 %v257
    %v1021 = vunpack.c.l.b16 %v258
    %v1022 = vunpack.c.h.b16 %v258
    %v1023 = vunpack.c.l.b16 %v259
    %v1024 = vunpack.c.h.b16 %v259
    %v1025 = vunpack.c.l.b16 %v260
    %v1026 = vunpack.c.h.b16 %v260
    %v1027 = vunpack.c.l.b16 %v261
    %v1028 = vunpack.c.h.b16 %v261
    %v1029 = vunpack.c.l.b16 %v262
    %v1030 = vunpack.c.h.b16 %v262
    %v1031 = vunpack.c.l.b16 %v263
    %v1032 = vunpack.c.h.b16 %v263
    %v1033 = vunpack.c.l.b16 %v264
    %v1034 = vunpack.c.h.b16 %v264
    %v1035 = vunpack.c.l.b16 %v265
    %v1036 = vunpack.c.h.b16 %v265
    %v1037 = vunpack.c.l.b16 %v266
    %v1038 = vunpack.c.h.b16 %v266
    %v1039 = vunpack.c.l.b16 %v267
    %v1040 = vunpack.c.h.b16 %v267
    %v1041 = vunpack.c.l.b16 %v268
    %v1042 = vunpack.c.h.b16 %v268
    %v1043 = vunpack.c.l.b16 %v269
    %v1044 = vunpack.c.h.b16 %v269
    %v1045 = vunpack.c.l.b16 %v270
    %v1046 = vunpack.c.h.b16 %v270
    %v1047 = vunpack.c.l.b16 %v271
    %v1048 = vunpack.c.h.b16 %v271
    %v1049 = vunpack.c.l.b16 %v272
    %v1050 = vunpack.c.h.b16 %v272
    %v1051 = vunpack.c.l.b16 %v273
    %v1052 = vunpack.c.h.b16 %v273
    %v1053 = vunpack.c.l.b16 %v274
    %v1054 = vunpack.c.h.b16 %v274
    %v1055 = vunpack.c.l.b16 %v275
    %v1056 = vunpack.c.h.b16 %v275
    %v1057 = vunpack.c.l.b16 %v276
    %v1058 = vunpack.c.h.b16 %v276
    %v1059 = vunpack.c.l.b16 %v277
    %v1060 = vunpack.c.h.b16 %v277
    %v1061 = vunpack.c.l.b16 %v278
    %v1062 = vunpack.c.h.b16 %v278
    %v1063 = vunpack.c.l.b16 %v279
    %v1064 = vunpack.c.h.b16 %v279
    %v1065 = vunpack.c.l.b16 %v280
    %v1066 = vunpack.c.h.b16 %v280
    %v1067 = vunpack.c.l.b16 %v281
    %v1068 = vunpack.c.h.b16 %v281
    %v1069 = vunpack.c.l.b16 %v282
    %v1070 = vunpack.c.h.b16 %v282
    %v1071 = vunpack.c.l.b16 %v283
    %v1072 = vunpack.c.h.b16 %v283
    %v1073 = vunpack.c.l.b16 %v284
    %v1074 = vunpack.c.h.b16 %v284
    %v1075 = vunpack.c.l.b16 %v285
    %v1076 = vunpack.c.h.b16 %v285
    %v1077 = vunpack.c.l.b16 %v286
    %v1078 = vunpack.c.h.b16 %v286
    %v1079 = vunpack.c.l.b16 %v287
    %v1080 = vunpack.c.h.b16 %v287
    %v1081 = vunpack.c.l.b16 %v288
    %v1082 = vunpack.c.h.b16 %v288
    %v1083 = vunpack.c.l.b16 %v289
    %v1084 = vunpack.c.h.b16 %v289
    %v1085 = vunpack.c.l.b16 %v290
    %v1086 = vunpack.c.h.b16 %v290
    %v1087 = vpack.c.b16 %v579, %v575
    %v1088 = vpack.c.b16 %v580, %v576
    %v1089 = vpack.c.b16 %v581, %v577
    %v1090 = vpack.c.b16 %v582, %v578
    %v1091 = vpack.c.b16 %v587, %v583
    %v1092 = vpack.c.b16 %v588, %v584
    %v1093 = vpack.c.b16 %v589, %v585
    %v1094 = vpack.c.b16 %v590, %v586
    %v1095 = vpack.c.b16 %v595, %v591
    %v1096 = vpack.c.b16 %v596, %v592
    %v1097 = vpack.c.b16 %v597, %v593
    %v1098 = vpack.c.b16 %v598, %v594
    %v1099 = vpack.c.b16 %v603, %v599
    %v1100 = vpack.c.b16 %v604, %v600
    %v1101 = vpack.c.b16 %v605, %v601
    %v1102 = vpack.c.b16 %v606, %v602
    %v1103 = vpack.c.b16 %v611, %v607
    %v1104 = vpack.c.b16 %v612, %v608
    %v1105 = vpack.c.b16 %v613, %v609
    %v1106 = vpack.c.b16 %v614, %v610
    %v1107 = vpack.c.b16 %v619, %v615
    %v1108 = vpack.c.b16 %v620, %v616
    %v1109 = vpack.c.b16 %v621, %v617
    %v1110 = vpack.c.b16 %v622, %v618
    %v1111 = vpack.c.b16 %v627, %v623
    %v1112 = vpack.c.b16 %v628, %v624
    %v1113 = vpack.c.b16 %v629, %v625
    %v1114 = vpack.c.b16 %v630, %v626
    %v1115 = vpack.c.b16 %v635, %v631
    %v1116 = vpack.c.b16 %v636, %v632
    %v1117 = vpack.c.b16 %v637, %v633
    %v1118 = vpack.c.b16 %v638, %v634
    %v1119 = vpack.c.b16 %v643, %v639
    %v1120 = vpack.c.b16 %v644, %v640
    %v1121 = vpack.c.b16 %v645, %v641
    %v1122 = vpack.c.b16 %v646, %v642
    %v1123 = vpack.c.b16 %v651, %v647
    %v1124 = vpack.c.b16 %v652, %v648
    %v1125 = vpack.c.b16 %v653, %v649
    %v1126 = vpack.c.b16 %v654, %v650
    %v1127 = vpack.c.b16 %v659, %v655
    %v1128 = vpack.c.b16 %v660, %v656
    %v1129 = vpack.c.b16 %v661, %v657
    %v1130 = vpack.c.b16 %v662, %v658
    %v1131 = vpack.c.b16 %v667, %v663
    %v1132 = vpack.c.b16 %v668, %v664
    %v1133 = vpack.c.b16 %v669, %v665
    %v1134 = vpack.c.b16 %v670, %v666
    %v1135 = vpack.c.b16 %v675, %v671
    %v1136 = vpack.c.b16 %v676, %v672
    %v1137 = vpack.c.b16 %v677, %v673
    %v1138 = vpack.c.b16 %v678, %v674
    %v1139 = vpack.c.b16 %v683, %v679
    %v1140 = vpack.c.b16 %v684, %v680
    %v1141 = vpack.c.b16 %v685, %v681
    %v1142 = vpack.c.b16 %v686, %v682
    %v1143 = vpack.c.b16 %v691, %v687
    %v1144 = vpack.c.b16 %v692, %v688
    %v1145 = vpack.c.b16 %v693, %v689
    %v1146 = vpack.c.b16 %v694, %v690
    %v1147 = vpack.c.b16 %v699, %v695
    %v1148 = vpack.c.b16 %v700, %v696
    %v1149 = vpack.c.b16 %v701, %v697
    %v1150 = vpack.c.b16 %v702, %v698
    %v1151 = vpack.c.b16 %v707, %v703
    %v1152 = vpack.c.b16 %v708, %v704
    %v1153 = vpack.c.b16 %v709, %v705
    %v1154 = vpack.c.b16 %v710, %v706
    %v1155 = vpack.c.b16 %v715, %v711
    %v1156 = vpack.c.b16 %v716, %v712
    %v1157 = vpack.c.b16 %v717, %v713
    %v1158 = vpack.c.b16 %v718, %v714
    %v1159 = vpack.c.b16 %v723, %v719
    %v1160 = vpack.c.b16 %v724, %v720
    %v1161 = vpack.c.b16 %v725, %v721
    %v1162 = vpack.c.b16 %v726, %v722
    %v1163 = vpack.c.b16 %v731, %v727
    %v1164 = vpack.c.b16 %v732, %v728
    %v1165 = vpack.c.b16 %v733, %v729
    %v1166 = vpack.c.b16 %v734, %v730
    %v1167 = vpack.c.b16 %v739, %v735
    %v1168 = vpack.c.b16 %v740, %v736
    %v1169 = vpack.c.b16 %v741, %v737
    %v1170 = vpack.c.b16 %v742, %v738
    %v1171 = vpack.c.b16 %v747, %v743
    %v1172 = vpack.c.b16 %v748, %v744
    %v1173 = vpack.c.b16 %v749, %v745
    %v1174 = vpack.c.b16 %v750, %v746
    %v1175 = vpack.c.b16 %v755, %v751
    %v1176 = vpack.c.b16 %v756, %v752
    %v1177 = vpack.c.b16 %v757, %v753
    %v1178 = vpack.c.b16 %v758, %v754
    %v1179 = vpack.c.b16 %v763, %v759
    %v1180 = vpack.c.b16 %v764, %v760
    %v1181 = vpack.c.b16 %v765, %v761
    %v1182 = vpack.c.b16 %v766, %v762
    %v1183 = vpack.c.b16 %v771, %v767
    %v1184 = vpack.c.b16 %v772, %v768
    %v1185 = vpack.c.b16 %v773, %v769
    %v1186 = vpack.c.b16 %v774, %v770
    %v1187 = vpack.c.b16 %v779, %v775
    %v1188 = vpack.c.b16 %v780, %v776
    %v1189 = vpack.c.b16 %v781, %v777
    %v1190 = vpack.c.b16 %v782, %v778
    %v1191 = vpack.c.b16 %v787, %v783
    %v1192 = vpack.c.b16 %v788, %v784
    %v1193 = vpack.c.b16 %v789, %v785
    %v1194 = vpack.c.b16 %v790, %v786
    %v1195 = vpack.c.b16 %v795, %v791
    %v1196 = vpack.c.b16 %v796, %v792
    %v1197 = vpack.c.b16 %v797, %v793
    %v1198 = vpack.c.b16 %v798, %v794
    %v1199 = vpack.c.b16 %v803, %v799
    %v1200 = vpack.c.b16 %v804, %v800
    %v1201 = vpack.c.b16 %v805, %v801
    %v1202 = vpack.c.b16 %v806, %v802
    %v1203 = vpack.c.b16 %v811, %v807
    %v1204 = vpack.c.b16 %v812, %v808
    %v1205 = vpack.c.b16 %v813, %v809
    %v1206 = vpack.c.b16 %v814, %v810
    %v1207 = vpack.c.b16 %v819, %v815
    %v1208 = vpack.c.b16 %v820, %v816
    %v1209 = vpack.c.b16 %v821, %v817
    %v1210 = vpack.c.b16 %v822, %v818
    %v1211 = vpack.c.b16 %v827, %v823
    %v1212 = vpack.c.b16 %v828, %v824
    %v1213 = vpack.c.b16 %v829, %v825
    %v1214 = vpack.c.b16 %v830, %v826
    %v1215 = vpack.c.b16 %v835, %v831
    %v1216 = vpack.c.b16 %v836, %v832
    %v1217 = vpack.c.b16 %v837, %v833
    %v1218 = vpack.c.b16 %v838, %v834
    %v1219 = vpack.c.b16 %v843, %v839
    %v1220 = vpack.c.b16 %v844, %v840
    %v1221 = vpack.c.b16 %v845, %v841
    %v1222 = vpack.c.b16 %v846, %v842
    %v1223 = vpack.c.b16 %v851, %v847
    %v1224 = vpack.c.b16 %v852, %v848
    %v1225 = vpack.c.b16 %v853, %v849
    %v1226 = vpack.c.b16 %v854, %v850
    %v1227 = vpack.c.b16 %v859, %v855
    %v1228 = vpack.c.b16 %v860, %v856
    %v1229 = vpack.c.b16 %v861, %v857
    %v1230 = vpack.c.b16 %v862, %v858
    %v1231 = vpack.c.b16 %v867, %v863
    %v1232 = vpack.c.b16 %v868, %v864
    %v1233 = vpack.c.b16 %v869, %v865
    %v1234 = vpack.c.b16 %v870, %v866
    %v1235 = vpack.c.b16 %v875, %v871
    %v1236 = vpack.c.b16 %v876, %v872
    %v1237 = vpack.c.b16 %v877, %v873
    %v1238 = vpack.c.b16 %v878, %v874
    %v1239 = vpack.c.b16 %v883, %v879
    %v1240 = vpack.c.b16 %v884, %v880
    %v1241 = vpack.c.b16 %v885, %v881
    %v1242 = vpack.c.b16 %v886, %v882
    %v1243 = vpack.c.b16 %v891, %v887
    %v1244 = vpack.c.b16 %v892, %v888
    %v1245 = vpack.c.b16 %v893, %v889
    %v1246 = vpack.c.b16 %v894, %v890
    %v1247 = vpack.c.b16 %v899, %v895
    %v1248 = vpack.c.b16 %v900, %v896
    %v1249 = vpack.c.b16 %v901, %v897
    %v1250 = vpack.c.b16 %v902, %v898
    %v1251 = vpack.c.b16 %v907, %v903
    %v1252 = vpack.c.b16 %v908, %v904
    %v1253 = vpack.c.b16 %v909, %v905
    %v1254 = vpack.c.b16 %v910, %v906
    %v1255 = vpack.c.b16 %v915, %v911
    %v1256 = vpack.c.b16 %v916, %v912
    %v1257 = vpack.c.b16 %v917, %v913
    %v1258 = vpack.c.b16 %v918, %v914
    %v1259 = vpack.c.b16 %v923, %v919
    %v1260 = vpack.c.b16 %v924, %v920
    %v1261 = vpack.c.b16 %v925, %v921
    %v1262 = vpack.c.b16 %v926, %v922
    %v1263 = vpack.c.b16 %v931, %v927
    %v1264 = vpack.c.b16 %v932, %v928
    %v1265 = vpack.c.b16 %v933, %v929
    %v1266 = vpack.c.b16 %v934, %v930
    %v1267 = vpack.c.b16 %v939, %v935
    %v1268 = vpack.c.b16 %v940, %v936
    %v1269 = vpack.c.b16 %v941, %v937
    %v1270 = vpack.c.b16 %v942, %v938
    %v1271 = vpack.c.b16 %v947, %v943
    %v1272 = vpack.c.b16 %v948, %v944
    %v1273 = vpack.c.b16 %v949, %v945
    %v1274 = vpack.c.b16 %v950, %v946
    %v1275 = vpack.c.b16 %v955, %v951
    %v1276 = vpack.c.b16 %v956, %v952
    %v1277 = vpack.c.b16 %v957, %v953
    %v1278 = vpack.c.b16 %v958, %v954
    %v1279 = vpack.c.b16 %v963, %v959
    %v1280 = vpack.c.b16 %v964, %v960
    %v1281 = vpack.c.b16 %v965, %v961
    %v1282 = vpack.c.b16 %v966, %v962
    %v1283 = vpack.c.b16 %v971, %v967
    %v1284 = vpack.c.b16 %v972, %v968
    %v1285 = vpack.c.b16 %v973, %v969
    %v1286 = vpack.c.b16 %v974, %v970
    %v1287 = vpack.c.b16 %v979, %v975
    %v1288 = vpack.c.b16 %v980, %v976
    %v1289 = vpack.c.b16 %v981, %v977
    %v1290 = vpack.c.b16 %v982, %v978
    %v1291 = vpack.c.b16 %v987, %v983
    %v1292 = vpack.c.b16 %v988, %v984
    %v1293 = vpack.c.b16 %v989, %v985
    %v1294 = vpack.c.b16 %v990, %v986
    %v1295 = vpack.c.b16 %v995, %v991
    %v1296 = vpack.c.b16 %v996, %v992
    %v1297 = vpack.c.b16 %v997, %v993
    %v1298 = vpack.c.b16 %v998, %v994
    %v1299 = vpack.c.b16 %v1003, %v999
    %v1300 = vpack.c.b16 %v1004, %v1000
    %v1301 = vpack.c.b16 %v1005, %v1001
    %v1302 = vpack.c.b16 %v1006, %v1002
    %v1303 = vpack.c.b16 %v1011, %v1007
    %v1304 = vpack.c.b16 %v1012, %v1008
    %v1305 = vpack.c.b16 %v1013, %v1009
    %v1306 = vpack.c.b16 %v1014, %v1010
    %v1307 = vpack.c.b16 %v1019, %v1015
    %v1308 = vpack.c.b16 %v1020, %v1016
    %v1309 = vpack.c.b16 %v1021, %v1017
    %v1310 = vpack.c.b16 %v1022, %v1018
    %v1311 = vpack.c.b16 %v1027, %v1023
    %v1312 = vpack.c.b16 %v1028, %v1024
    %v1313 = vpack.c.b16 %v1029, %v1025
    %v1314 = vpack.c.b16 %v1030, %v1026
    %v1315 = vpack.c.b16 %v1035, %v1031
    %v1316 = vpack.c.b16 %v1036, %v1032
    %v1317 = vpack.c.b16 %v1037, %v1033
    %v1318 = vpack.c.b16 %v1038, %v1034
    %v1319 = vpack.c.b16 %v1043, %v1039
    %v1320 = vpack.c.b16 %v1044, %v1040
    %v1321 = vpack.c.b16 %v1045, %v1041
    %v1322 = vpack.c.b16 %v1046, %v1042
    %v1323 = vpack.c.b16 %v1051, %v1047
    %v1324 = vpack.c.b16 %v1052, %v1048
    %v1325 = vpack.c.b16 %v1053, %v1049
    %v1326 = vpack.c.b16 %v1054, %v1050
    %v1327 = vpack.c.b16 %v1059, %v1055
    %v1328 = vpack.c.b16 %v1060, %v1056
    %v1329 = vpack.c.b16 %v1061, %v1057
    %v1330 = vpack.c.b16 %v1062, %v1058
    %v1331 = vpack.c.b16 %v1067, %v1063
    %v1332 = vpack.c.b16 %v1068, %v1064
    %v1333 = vpack.c.b16 %v1069, %v1065
    %v1334 = vpack.c.b16 %v1070, %v1066
    %v1335 = vpack.c.b16 %v1075, %v1071
    %v1336 = vpack.c.b16 %v1076, %v1072
    %v1337 = vpack.c.b16 %v1077, %v1073
    %v1338 = vpack.c.b16 %v1078, %v1074
    %v1339 = vpack.c.b16 %v1083, %v1079
    %v1340 = vpack.c.b16 %v1084, %v1080
    %v1341 = vpack.c.b16 %v1085, %v1081
    %v1342 = vpack.c.b16 %v1086, %v1082
    %1599 = vmatprep.subr.bf16.mxu0 %v1088
    %1600 = vmatpush1.bf16.msra.mxu0 %v1087
    %1601 = vmatprep.subr.bf16.mxu0 %v1092
    %1602 = vmatpush1.bf16.msra.mxu0 %v1091
    %1603 = vmatprep.subr.bf16.mxu0 %v1096
    %1604 = vmatpush1.bf16.msra.mxu0 %v1095
    %1605 = vmatprep.subr.bf16.mxu0 %v1100
    %1606 = vmatpush1.bf16.msra.mxu0 %v1099
    %1607 = vmatprep.subr.bf16.mxu0 %v1104
    %1608 = vmatpush1.bf16.msra.mxu0 %v1103
    %1609 = vmatprep.subr.bf16.mxu0 %v1108
    %1610 = vmatpush1.bf16.msra.mxu0 %v1107
    %1611 = vmatprep.subr.bf16.mxu0 %v1112
    %1612 = vmatpush1.bf16.msra.mxu0 %v1111
    %1613 = vmatprep.subr.bf16.mxu0 %v1116
    %1614 = vmatpush1.bf16.msra.mxu0 %v1115
    %1615 = vmatprep.subr.bf16.mxu0 %v1120
    %1616 = vmatpush1.bf16.msra.mxu0 %v1119
    %1617 = vmatprep.subr.bf16.mxu0 %v1124
    %1618 = vmatpush1.bf16.msra.mxu0 %v1123
    %1619 = vmatprep.subr.bf16.mxu0 %v1128
    %1620 = vmatpush1.bf16.msra.mxu0 %v1127
    %1621 = vmatprep.subr.bf16.mxu0 %v1132
    %1622 = vmatpush1.bf16.msra.mxu0 %v1131
    %1623 = vmatprep.subr.bf16.mxu0 %v1136
    %1624 = vmatpush1.bf16.msra.mxu0 %v1135
    %1625 = vmatprep.subr.bf16.mxu0 %v1140
    %1626 = vmatpush1.bf16.msra.mxu0 %v1139
    %1627 = vmatprep.subr.bf16.mxu0 %v1144
    %1628 = vmatpush1.bf16.msra.mxu0 %v1143
    %1629 = vmatprep.subr.bf16.mxu0 %v1148
    %1630 = vmatpush1.bf16.msra.mxu0 %v1147
    %1631 = vmatprep.mubr.bf16.mxu0 %v304
    %1632 = vmatmul.mubr.bf16.gmra.mrb[0].mxu0 %v303
    %v1633 = vpop.f32.mrb[0].mxu0
    %v1634 = vadd.f32 0.0, %v1633
    %v1635 = vpop.f32.mrb[0].mxu0
    %v1636 = vadd.f32 0.0, %v1635
    %v1637 = vpop.f32.mrb[0].mxu0
    %v1638 = vpop.f32.mrb[0].mxu0
    %1639 = vdwg.mxu0
    %1640 = vmatprep.subr.bf16.mxu0 %v1152
    %1641 = vmatpush1.bf16.msra.mxu0 %v1151
    %1642 = vmatprep.subr.bf16.mxu0 %v1156
    %1643 = vmatpush1.bf16.msra.mxu0 %v1155
    %1644 = vmatprep.subr.bf16.mxu0 %v1160
    %1645 = vmatpush1.bf16.msra.mxu0 %v1159
    %1646 = vmatprep.subr.bf16.mxu0 %v1164
    %1647 = vmatpush1.bf16.msra.mxu0 %v1163
    %1648 = vmatprep.subr.bf16.mxu0 %v1168
    %1649 = vmatpush1.bf16.msra.mxu0 %v1167
    %1650 = vmatprep.subr.bf16.mxu0 %v1172
    %1651 = vmatpush1.bf16.msra.mxu0 %v1171
    %1652 = vmatprep.subr.bf16.mxu0 %v1176
    %1653 = vmatpush1.bf16.msra.mxu0 %v1175
    %1654 = vmatprep.subr.bf16.mxu0 %v1180
    %1655 = vmatpush1.bf16.msra.mxu0 %v1179
    %1656 = vmatprep.subr.bf16.mxu0 %v1184
    %1657 = vmatpush1.bf16.msra.mxu0 %v1183
    %1658 = vmatprep.subr.bf16.mxu0 %v1188
    %1659 = vmatpush1.bf16.msra.mxu0 %v1187
    %1660 = vmatprep.subr.bf16.mxu0 %v1192
    %1661 = vmatpush1.bf16.msra.mxu0 %v1191
    %1662 = vmatprep.subr.bf16.mxu0 %v1196
    %1663 = vmatpush1.bf16.msra.mxu0 %v1195
    %1664 = vmatprep.subr.bf16.mxu0 %v1200
    %1665 = vmatpush1.bf16.msra.mxu0 %v1199
    %1666 = vmatprep.subr.bf16.mxu0 %v1204
    %1667 = vmatpush1.bf16.msra.mxu0 %v1203
    %1668 = vmatprep.subr.bf16.mxu0 %v1208
    %1669 = vmatpush1.bf16.msra.mxu0 %v1207
    %1670 = vmatprep.subr.bf16.mxu0 %v1212
    %1671 = vmatpush1.bf16.msra.mxu0 %v1211
    %1672 = vmatprep.mubr.bf16.mxu0 %v306
    %1673 = vmatmul.mubr.bf16.gmra.mrb[0].mxu0 %v305
    %v1674 = vpop.f32.mrb[0].mxu0
    %v1675 = vadd.f32 %v1634, %v1674
    %v1676 = vpop.f32.mrb[0].mxu0
    %v1677 = vadd.f32 %v1636, %v1676
    %v1678 = vpop.f32.mrb[0].mxu0
    %v1679 = vpop.f32.mrb[0].mxu0
    %1680 = vdwg.mxu0
    %1681 = vmatprep.subr.bf16.mxu0 %v1216
    %1682 = vmatpush1.bf16.msra.mxu0 %v1215
    %1683 = vmatprep.subr.bf16.mxu0 %v1220
    %1684 = vmatpush1.bf16.msra.mxu0 %v1219
    %1685 = vmatprep.subr.bf16.mxu0 %v1224
    %1686 = vmatpush1.bf16.msra.mxu0 %v1223
    %1687 = vmatprep.subr.bf16.mxu0 %v1228
    %1688 = vmatpush1.bf16.msra.mxu0 %v1227
    %1689 = vmatprep.subr.bf16.mxu0 %v1232
    %1690 = vmatpush1.bf16.msra.mxu0 %v1231
    %1691 = vmatprep.subr.bf16.mxu0 %v1236
    %1692 = vmatpush1.bf16.msra.mxu0 %v1235
    %1693 = vmatprep.subr.bf16.mxu0 %v1240
    %1694 = vmatpush1.bf16.msra.mxu0 %v1239
    %1695 = vmatprep.subr.bf16.mxu0 %v1244
    %1696 = vmatpush1.bf16.msra.mxu0 %v1243
    %1697 = vmatprep.subr.bf16.mxu0 %v1248
    %1698 = vmatpush1.bf16.msra.mxu0 %v1247
    %1699 = vmatprep.subr.bf16.mxu0 %v1252
    %1700 = vmatpush1.bf16.msra.mxu0 %v1251
    %1701 = vmatprep.subr.bf16.mxu0 %v1256
    %1702 = vmatpush1.bf16.msra.mxu0 %v1255
    %1703 = vmatprep.subr.bf16.mxu0 %v1260
    %1704 = vmatpush1.bf16.msra.mxu0 %v1259
    %1705 = vmatprep.subr.bf16.mxu0 %v1264
    %1706 = vmatpush1.bf16.msra.mxu0 %v1263
    %1707 = vmatprep.subr.bf16.mxu0 %v1268
    %1708 = vmatpush1.bf16.msra.mxu0 %v1267
    %1709 = vmatprep.subr.bf16.mxu0 %v1272
    %1710 = vmatpush1.bf16.msra.mxu0 %v1271
    %1711 = vmatprep.subr.bf16.mxu0 %v1276
    %1712 = vmatpush1.bf16.msra.mxu0 %v1275
    %1713 = vmatprep.mubr.bf16.mxu0 %v308
    %1714 = vmatmul.mubr.bf16.gmra.mrb[0].mxu0 %v307
    %v1715 = vpop.f32.mrb[0].mxu0
    %v1716 = vadd.f32 %v1675, %v1715
    %v1717 = vpop.f32.mrb[0].mxu0
    %v1718 = vadd.f32 %v1677, %v1717
    %v1719 = vpop.f32.mrb[0].mxu0
    %v1720 = vpop.f32.mrb[0].mxu0
    %1721 = vdwg.mxu0
    %1722 = vmatprep.subr.bf16.mxu0 %v1280
    %1723 = vmatpush1.bf16.msra.mxu0 %v1279
    %1724 = vmatprep.subr.bf16.mxu0 %v1284
    %1725 = vmatpush1.bf16.msra.mxu0 %v1283
    %1726 = vmatprep.subr.bf16.mxu0 %v1288
    %1727 = vmatpush1.bf16.msra.mxu0 %v1287
    %1728 = vmatprep.subr.bf16.mxu0 %v1292
    %1729 = vmatpush1.bf16.msra.mxu0 %v1291
    %1730 = vmatprep.subr.bf16.mxu0 %v1296
    %1731 = vmatpush1.bf16.msra.mxu0 %v1295
    %1732 = vmatprep.subr.bf16.mxu0 %v1300
    %1733 = vmatpush1.bf16.msra.mxu0 %v1299
    %1734 = vmatprep.subr.bf16.mxu0 %v1304
    %1735 = vmatpush1.bf16.msra.mxu0 %v1303
    %1736 = vmatprep.subr.bf16.mxu0 %v1308
    %1737 = vmatpush1.bf16.msra.mxu0 %v1307
    %1738 = vmatprep.subr.bf16.mxu0 %v1312
    %1739 = vmatpush1.bf16.msra.mxu0 %v1311
    %1740 = vmatprep.subr.bf16.mxu0 %v1316
    %1741 = vmatpush1.bf16.msra.mxu0 %v1315
    %1742 = vmatprep.subr.bf16.mxu0 %v1320
    %1743 = vmatpush1.bf16.msra.mxu0 %v1319
    %1744 = vmatprep.subr.bf16.mxu0 %v1324
    %1745 = vmatpush1.bf16.msra.mxu0 %v1323
    %1746 = vmatprep.subr.bf16.mxu0 %v1328
    %1747 = vmatpush1.bf16.msra.mxu0 %v1327
    %1748 = vmatprep.subr.bf16.mxu0 %v1332
    %1749 = vmatpush1.bf16.msra.mxu0 %v1331
    %1750 = vmatprep.subr.bf16.mxu0 %v1336
    %1751 = vmatpush1.bf16.msra.mxu0 %v1335
    %1752 = vmatprep.subr.bf16.mxu0 %v1340
    %1753 = vmatpush1.bf16.msra.mxu0 %v1339
    %1754 = vmatprep.mubr.bf16.mxu0 %v310
    %1755 = vmatmul.mubr.bf16.gmra.mrb[0].mxu0 %v309
    %v1756 = vpop.f32.mrb[0].mxu0
    %v1757 = vadd.f32 %v1716, %v1756
    %v1758 = vpop.f32.mrb[0].mxu0
    %v1759 = vadd.f32 %v1718, %v1758
    %v1760 = vpop.f32.mrb[0].mxu0
    %v1761 = vpop.f32.mrb[0].mxu0
    %1762 = vdwg.mxu0
    %1763 = vmatprep.subr.bf16.mxu0 %v1090
    %1764 = vmatpush1.bf16.msra.mxu0 %v1089
    %1765 = vmatprep.subr.bf16.mxu0 %v1094
    %1766 = vmatpush1.bf16.msra.mxu0 %v1093
    %1767 = vmatprep.subr.bf16.mxu0 %v1098
    %1768 = vmatpush1.bf16.msra.mxu0 %v1097
    %1769 = vmatprep.subr.bf16.mxu0 %v1102
    %1770 = vmatpush1.bf16.msra.mxu0 %v1101
    %1771 = vmatprep.subr.bf16.mxu0 %v1106
    %1772 = vmatpush1.bf16.msra.mxu0 %v1105
    %1773 = vmatprep.subr.bf16.mxu0 %v1110
    %1774 = vmatpush1.bf16.msra.mxu0 %v1109
    %1775 = vmatprep.subr.bf16.mxu0 %v1114
    %1776 = vmatpush1.bf16.msra.mxu0 %v1113
    %1777 = vmatprep.subr.bf16.mxu0 %v1118
    %1778 = vmatpush1.bf16.msra.mxu0 %v1117
    %1779 = vmatprep.subr.bf16.mxu0 %v1122
    %1780 = vmatpush1.bf16.msra.mxu0 %v1121
    %1781 = vmatprep.subr.bf16.mxu0 %v1126
    %1782 = vmatpush1.bf16.msra.mxu0 %v1125
    %1783 = vmatprep.subr.bf16.mxu0 %v1130
    %1784 = vmatpush1.bf16.msra.mxu0 %v1129
    %1785 = vmatprep.subr.bf16.mxu0 %v1134
    %1786 = vmatpush1.bf16.msra.mxu0 %v1133
    %1787 = vmatprep.subr.bf16.mxu0 %v1138
    %1788 = vmatpush1.bf16.msra.mxu0 %v1137
    %1789 = vmatprep.subr.bf16.mxu0 %v1142
    %1790 = vmatpush1.bf16.msra.mxu0 %v1141
    %1791 = vmatprep.subr.bf16.mxu0 %v1146
    %1792 = vmatpush1.bf16.msra.mxu0 %v1145
    %1793 = vmatprep.subr.bf16.mxu0 %v1150
    %1794 = vmatpush1.bf16.msra.mxu0 %v1149
    %1795 = vmatprep.mubr.bf16.mxu0 %v304
    %1796 = vmatmul.mubr.bf16.gmra.mrb[0].mxu0 %v303
    %v1797 = vpop.f32.mrb[0].mxu0
    %v1798 = vadd.f32 0.0, %v1797
    %v1799 = vpop.f32.mrb[0].mxu0
    %v1800 = vadd.f32 0.0, %v1799
    %v1801 = vpop.f32.mrb[0].mxu0
    %v1802 = vpop.f32.mrb[0].mxu0
    %1803 = vdwg.mxu0
    %1804 = vmatprep.subr.bf16.mxu0 %v1154
    %1805 = vmatpush1.bf16.msra.mxu0 %v1153
    %1806 = vmatprep.subr.bf16.mxu0 %v1158
    %1807 = vmatpush1.bf16.msra.mxu0 %v1157
    %1808 = vmatprep.subr.bf16.mxu0 %v1162
    %1809 = vmatpush1.bf16.msra.mxu0 %v1161
    %1810 = vmatprep.subr.bf16.mxu0 %v1166
    %1811 = vmatpush1.bf16.msra.mxu0 %v1165
    %1812 = vmatprep.subr.bf16.mxu0 %v1170
    %1813 = vmatpush1.bf16.msra.mxu0 %v1169
    %1814 = vmatprep.subr.bf16.mxu0 %v1174
    %1815 = vmatpush1.bf16.msra.mxu0 %v1173
    %1816 = vmatprep.subr.bf16.mxu0 %v1178
    %1817 = vmatpush1.bf16.msra.mxu0 %v1177
    %1818 = vmatprep.subr.bf16.mxu0 %v1182
    %1819 = vmatpush1.bf16.msra.mxu0 %v1181
    %1820 = vmatprep.subr.bf16.mxu0 %v1186
    %1821 = vmatpush1.bf16.msra.mxu0 %v1185
    %1822 = vmatprep.subr.bf16.mxu0 %v1190
    %1823 = vmatpush1.bf16.msra.mxu0 %v1189
    %1824 = vmatprep.subr.bf16.mxu0 %v1194
    %1825 = vmatpush1.bf16.msra.mxu0 %v1193
    %1826 = vmatprep.subr.bf16.mxu0 %v1198
    %1827 = vmatpush1.bf16.msra.mxu0 %v1197
    %1828 = vmatprep.subr.bf16.mxu0 %v1202
    %1829 = vmatpush1.bf16.msra.mxu0 %v1201
    %1830 = vmatprep.subr.bf16.mxu0 %v1206
    %1831 = vmatpush1.bf16.msra.mxu0 %v1205
    %1832 = vmatprep.subr.bf16.mxu0 %v1210
    %1833 = vmatpush1.bf16.msra.mxu0 %v1209
    %1834 = vmatprep.subr.bf16.mxu0 %v1214
    %1835 = vmatpush1.bf16.msra.mxu0 %v1213
    %1836 = vmatprep.mubr.bf16.mxu0 %v306
    %1837 = vmatmul.mubr.bf16.gmra.mrb[0].mxu0 %v305
    %v1838 = vpop.f32.mrb[0].mxu0
    %v1839 = vadd.f32 %v1798, %v1838
    %v1840 = vpop.f32.mrb[0].mxu0
    %v1841 = vadd.f32 %v1800, %v1840
    %v1842 = vpop.f32.mrb[0].mxu0
    %v1843 = vpop.f32.mrb[0].mxu0
    %1844 = vdwg.mxu0
    %1845 = vmatprep.subr.bf16.mxu0 %v1218
    %1846 = vmatpush1.bf16.msra.mxu0 %v1217
    %1847 = vmatprep.subr.bf16.mxu0 %v1222
    %1848 = vmatpush1.bf16.msra.mxu0 %v1221
    %1849 = vmatprep.subr.bf16.mxu0 %v1226
    %1850 = vmatpush1.bf16.msra.mxu0 %v1225
    %1851 = vmatprep.subr.bf16.mxu0 %v1230
    %1852 = vmatpush1.bf16.msra.mxu0 %v1229
    %1853 = vmatprep.subr.bf16.mxu0 %v1234
    %1854 = vmatpush1.bf16.msra.mxu0 %v1233
    %1855 = vmatprep.subr.bf16.mxu0 %v1238
    %1856 = vmatpush1.bf16.msra.mxu0 %v1237
    %1857 = vmatprep.subr.bf16.mxu0 %v1242
    %1858 = vmatpush1.bf16.msra.mxu0 %v1241
    %1859 = vmatprep.subr.bf16.mxu0 %v1246
    %1860 = vmatpush1.bf16.msra.mxu0 %v1245
    %1861 = vmatprep.subr.bf16.mxu0 %v1250
    %1862 = vmatpush1.bf16.msra.mxu0 %v1249
    %1863 = vmatprep.subr.bf16.mxu0 %v1254
    %1864 = vmatpush1.bf16.msra.mxu0 %v1253
    %1865 = vmatprep.subr.bf16.mxu0 %v1258
    %1866 = vmatpush1.bf16.msra.mxu0 %v1257
    %1867 = vmatprep.subr.bf16.mxu0 %v1262
    %1868 = vmatpush1.bf16.msra.mxu0 %v1261
    %1869 = vmatprep.subr.bf16.mxu0 %v1266
    %1870 = vmatpush1.bf16.msra.mxu0 %v1265
    %1871 = vmatprep.subr.bf16.mxu0 %v1270
    %1872 = vmatpush1.bf16.msra.mxu0 %v1269
    %1873 = vmatprep.subr.bf16.mxu0 %v1274
    %1874 = vmatpush1.bf16.msra.mxu0 %v1273
    %1875 = vmatprep.subr.bf16.mxu0 %v1278
    %1876 = vmatpush1.bf16.msra.mxu0 %v1277
    %1877 = vmatprep.mubr.bf16.mxu0 %v308
    %1878 = vmatmul.mubr.bf16.gmra.mrb[0].mxu0 %v307
    %v1879 = vpop.f32.mrb[0].mxu0
    %v1880 = vadd.f32 %v1839, %v1879
    %v1881 = vpop.f32.mrb[0].mxu0
    %v1882 = vadd.f32 %v1841, %v1881
    %v1883 = vpop.f32.mrb[0].mxu0
    %v1884 = vpop.f32.mrb[0].mxu0
    %1885 = vdwg.mxu0
    %1886 = vmatprep.subr.bf16.mxu0 %v1282
    %1887 = vmatpush1.bf16.msra.mxu0 %v1281
    %1888 = vmatprep.subr.bf16.mxu0 %v1286
    %1889 = vmatpush1.bf16.msra.mxu0 %v1285
    %1890 = vmatprep.subr.bf16.mxu0 %v1290
    %1891 = vmatpush1.bf16.msra.mxu0 %v1289
    %1892 = vmatprep.subr.bf16.mxu0 %v1294
    %1893 = vmatpush1.bf16.msra.mxu0 %v1293
    %1894 = vmatprep.subr.bf16.mxu0 %v1298
    %1895 = vmatpush1.bf16.msra.mxu0 %v1297
    %1896 = vmatprep.subr.bf16.mxu0 %v1302
    %1897 = vmatpush1.bf16.msra.mxu0 %v1301
    %1898 = vmatprep.subr.bf16.mxu0 %v1306
    %1899 = vmatpush1.bf16.msra.mxu0 %v1305
    %1900 = vmatprep.subr.bf16.mxu0 %v1310
    %1901 = vmatpush1.bf16.msra.mxu0 %v1309
    %1902 = vmatprep.subr.bf16.mxu0 %v1314
    %1903 = vmatpush1.bf16.msra.mxu0 %v1313
    %1904 = vmatprep.subr.bf16.mxu0 %v1318
    %1905 = vmatpush1.bf16.msra.mxu0 %v1317
    %1906 = vmatprep.subr.bf16.mxu0 %v1322
    %1907 = vmatpush1.bf16.msra.mxu0 %v1321
    %1908 = vmatprep.subr.bf16.mxu0 %v1326
    %1909 = vmatpush1.bf16.msra.mxu0 %v1325
    %1910 = vmatprep.subr.bf16.mxu0 %v1330
    %1911 = vmatpush1.bf16.msra.mxu0 %v1329
    %1912 = vmatprep.subr.bf16.mxu0 %v1334
    %1913 = vmatpush1.bf16.msra.mxu0 %v1333
    %1914 = vmatprep.subr.bf16.mxu0 %v1338
    %1915 = vmatpush1.bf16.msra.mxu0 %v1337
    %1916 = vmatprep.subr.bf16.mxu0 %v1342
    %1917 = vmatpush1.bf16.msra.mxu0 %v1341
    %1918 = vmatprep.mubr.bf16.mxu0 %v310
    %1919 = vmatmul.mubr.bf16.gmra.mrb[0].mxu0 %v309
    %v1920 = vpop.f32.mrb[0].mxu0
    %v1921 = vadd.f32 %v1880, %v1920
    %v1922 = vpop.f32.mrb[0].mxu0
    %v1923 = vadd.f32 %v1882, %v1922
    %v1924 = vpop.f32.mrb[0].mxu0
    %v1925 = vpop.f32.mrb[0].mxu0
    %1926 = vdwg.mxu0
    %v1928 = vlaneseq
    %v1929 = vshrl.u32 %v1928, 7
    %v1930 = vsub.s32 0, %v1929
    %v1931 = vrot.slane %v25, %v1930
    %v1932 = vlaneseq
    %v1933 = vshrl.u32 %v1932, 7
    %v1934 = vsub.s32 1, %v1933
    %v1935 = vrot.slane %v25, %v1934
    %v1936 = vlaneseq
    %v1937 = vshrl.u32 %v1936, 7
    %v1938 = vsub.s32 2, %v1937
    %v1939 = vrot.slane %v25, %v1938
    %v1940 = vlaneseq
    %v1941 = vshrl.u32 %v1940, 7
    %v1942 = vsub.s32 3, %v1941
    %v1943 = vrot.slane %v25, %v1942
    %v1948 = vmul.f32 %v1757, %v1931
    %v1949 = vmul.f32 %v1759, %v1935
    %v1950 = vmul.f32 %v1921, %v1939
    %v1951 = vmul.f32 %v1923, %v1943
    %v1952 = vld [vmem:[%s1] sm:$0xff]
    %1954 = vset.pattern.permute.xlu0 0
    %1955 = vperm.xlu0 %1954, %v1952
    %v1956 = vpop.permute.xlu0 %1955
    %v1959 = vlaneseq
    %v1960 = vshrl.u32 %v1959, 7
    %v1961 = vsub.s32 0, %v1960
    %v1962 = vrot.slane %v26, %v1961
    %v1963 = vlaneseq
    %v1964 = vshrl.u32 %v1963, 7
    %v1965 = vsub.s32 1, %v1964
    %v1966 = vrot.slane %v26, %v1965
    %v1967 = vlaneseq
    %v1968 = vshrl.u32 %v1967, 7
    %v1969 = vsub.s32 2, %v1968
    %v1970 = vrot.slane %v26, %v1969
    %v1971 = vlaneseq
    %v1972 = vshrl.u32 %v1971, 7
    %v1973 = vsub.s32 3, %v1972
    %v1974 = vrot.slane %v26, %v1973
    %v1979 = vmul.f32 %v1956, %v1962
    %v1980 = vmul.f32 %v1956, %v1966
    %v1981 = vmul.f32 %v1956, %v1970
    %v1982 = vmul.f32 %v1956, %v1974
    %v1983 = vadd.f32 %v1948, %v1979
    %v1984 = vadd.f32 %v1949, %v1980
    %v1985 = vadd.f32 %v1950, %v1981
    %v1986 = vadd.f32 %v1951, %v1982
    %v1988 = vlaneseq
    %v1989 = vshrl.u32 %v1988, 7
    %v1990 = vsub.s32 0, %v1989
    %v1991 = vrot.slane %v27, %v1990
    %v1992 = vlaneseq
    %v1993 = vshrl.u32 %v1992, 7
    %v1994 = vsub.s32 1, %v1993
    %v1995 = vrot.slane %v27, %v1994
    %v1996 = vlaneseq
    %v1997 = vshrl.u32 %v1996, 7
    %v1998 = vsub.s32 2, %v1997
    %v1999 = vrot.slane %v27, %v1998
    %v2000 = vlaneseq
    %v2001 = vshrl.u32 %v2000, 7
    %v2002 = vsub.s32 3, %v2001
    %v2003 = vrot.slane %v27, %v2002
    %v2008 = vadd.f32 %v1983, %v1991
    %v2009 = vadd.f32 %v1984, %v1995
    %v2010 = vadd.f32 %v1985, %v1999
    %v2011 = vadd.f32 %v1986, %v2003
    %v2012 = vmax.f32 %v2008, 0.0
    %v2013 = vmax.f32 %v2009, 0.0
    %v2014 = vmax.f32 %v2010, 0.0
    %v2015 = vmax.f32 %v2011, 0.0
    %v2016 = vpack.c.bf16 %v2012, %v2012
    %v2017 = vpack.c.bf16 %v2013, %v2013
    %v2018 = vpack.c.bf16 %v2014, %v2014
    %v2019 = vpack.c.bf16 %v2015, %v2015
    %v2020 = vld [vmem:[%s3] sm:$0xff]
    %v2021 = vld [vmem:[%s3 + $0x8] sm:$0xff]
    %v2022 = vld [vmem:[%s3 + $0x10] sm:$0xff]
    %v2023 = vld [vmem:[%s3 + $0x18] sm:$0xff]
    %v2024 = vld [vmem:[%s3 + $0x20] sm:$0xff]
    %v2025 = vld [vmem:[%s3 + $0x28] sm:$0xff]
    %v2026 = vld [vmem:[%s3 + $0x30] sm:$0xff]
    %v2027 = vld [vmem:[%s3 + $0x38] sm:$0xff]
    %v2028 = vld [vmem:[%s3 + $0x40] sm:$0xff]
    %v2029 = vld [vmem:[%s3 + $0x48] sm:$0xff]
    %v2030 = vld [vmem:[%s3 + $0x50] sm:$0xff]
    %v2031 = vld [vmem:[%s3 + $0x58] sm:$0xff]
    %v2032 = vld [vmem:[%s3 + $0x60] sm:$0xff]
    %v2033 = vld [vmem:[%s3 + $0x68] sm:$0xff]
    %v2034 = vld [vmem:[%s3 + $0x70] sm:$0xff]
    %v2035 = vld [vmem:[%s3 + $0x78] sm:$0xff]
    %v2036 = vld [vmem:[%s3 + $0x80] sm:$0xff]
    %v2037 = vld [vmem:[%s3 + $0x88] sm:$0xff]
    %v2038 = vld [vmem:[%s3 + $0x90] sm:$0xff]
    %v2039 = vld [vmem:[%s3 + $0x98] sm:$0xff]
    %v2040 = vld [vmem:[%s3 + $0xa0] sm:$0xff]
    %v2041 = vld [vmem:[%s3 + $0xa8] sm:$0xff]
    %v2042 = vld [vmem:[%s3 + $0xb0] sm:$0xff]
    %v2043 = vld [vmem:[%s3 + $0xb8] sm:$0xff]
    %v2044 = vld [vmem:[%s3 + $0xc0] sm:$0xff]
    %v2045 = vld [vmem:[%s3 + $0xc8] sm:$0xff]
    %v2046 = vld [vmem:[%s3 + $0xd0] sm:$0xff]
    %v2047 = vld [vmem:[%s3 + $0xd8] sm:$0xff]
    %v2048 = vld [vmem:[%s3 + $0xe0] sm:$0xff]
    %v2049 = vld [vmem:[%s3 + $0xe8] sm:$0xff]
    %v2050 = vld [vmem:[%s3 + $0xf0] sm:$0xff]
    %v2051 = vld [vmem:[%s3 + $0xf8] sm:$0xff]
    %v2052 = vld [vmem:[%s3 + $0x100] sm:$0xff]
    %v2053 = vld [vmem:[%s3 + $0x108] sm:$0xff]
    %v2054 = vld [vmem:[%s3 + $0x110] sm:$0xff]
    %v2055 = vld [vmem:[%s3 + $0x118] sm:$0xff]
    %v2056 = vld [vmem:[%s3 + $0x120] sm:$0xff]
    %v2057 = vld [vmem:[%s3 + $0x128] sm:$0xff]
    %v2058 = vld [vmem:[%s3 + $0x130] sm:$0xff]
    %v2059 = vld [vmem:[%s3 + $0x138] sm:$0xff]
    %v2060 = vld [vmem:[%s3 + $0x140] sm:$0xff]
    %v2061 = vld [vmem:[%s3 + $0x148] sm:$0xff]
    %v2062 = vld [vmem:[%s3 + $0x150] sm:$0xff]
    %v2063 = vld [vmem:[%s3 + $0x158] sm:$0xff]
    %v2064 = vld [vmem:[%s3 + $0x160] sm:$0xff]
    %v2065 = vld [vmem:[%s3 + $0x168] sm:$0xff]
    %v2066 = vld [vmem:[%s3 + $0x170] sm:$0xff]
    %v2067 = vld [vmem:[%s3 + $0x178] sm:$0xff]
    %v2068 = vld [vmem:[%s3 + $0x180] sm:$0xff]
    %v2069 = vld [vmem:[%s3 + $0x188] sm:$0xff]
    %v2070 = vld [vmem:[%s3 + $0x190] sm:$0xff]
    %v2071 = vld [vmem:[%s3 + $0x198] sm:$0xff]
    %v2072 = vld [vmem:[%s3 + $0x1a0] sm:$0xff]
    %v2073 = vld [vmem:[%s3 + $0x1a8] sm:$0xff]
    %v2074 = vld [vmem:[%s3 + $0x1b0] sm:$0xff]
    %v2075 = vld [vmem:[%s3 + $0x1b8] sm:$0xff]
    %v2076 = vld [vmem:[%s3 + $0x1c0] sm:$0xff]
    %v2077 = vld [vmem:[%s3 + $0x1c8] sm:$0xff]
    %v2078 = vld [vmem:[%s3 + $0x1d0] sm:$0xff]
    %v2079 = vld [vmem:[%s3 + $0x1d8] sm:$0xff]
    %v2080 = vld [vmem:[%s3 + $0x1e0] sm:$0xff]
    %v2081 = vld [vmem:[%s3 + $0x1e8] sm:$0xff]
    %v2082 = vld [vmem:[%s3 + $0x1f0] sm:$0xff]
    %v2083 = vld [vmem:[%s3 + $0x1f8] sm:$0xff]
    %v2148 = vunpack.c.l.b16 %v2020
    %v2149 = vunpack.c.h.b16 %v2020
    %v2150 = vunpack.c.l.b16 %v2021
    %v2151 = vunpack.c.h.b16 %v2021
    %v2152 = vunpack.c.l.b16 %v2022
    %v2153 = vunpack.c.h.b16 %v2022
    %v2154 = vunpack.c.l.b16 %v2023
    %v2155 = vunpack.c.h.b16 %v2023
    %v2156 = vunpack.c.l.b16 %v2024
    %v2157 = vunpack.c.h.b16 %v2024
    %v2158 = vunpack.c.l.b16 %v2025
    %v2159 = vunpack.c.h.b16 %v2025
    %v2160 = vunpack.c.l.b16 %v2026
    %v2161 = vunpack.c.h.b16 %v2026
    %v2162 = vunpack.c.l.b16 %v2027
    %v2163 = vunpack.c.h.b16 %v2027
    %v2164 = vunpack.c.l.b16 %v2028
    %v2165 = vunpack.c.h.b16 %v2028
    %v2166 = vunpack.c.l.b16 %v2029
    %v2167 = vunpack.c.h.b16 %v2029
    %v2168 = vunpack.c.l.b16 %v2030
    %v2169 = vunpack.c.h.b16 %v2030
    %v2170 = vunpack.c.l.b16 %v2031
    %v2171 = vunpack.c.h.b16 %v2031
    %v2172 = vunpack.c.l.b16 %v2032
    %v2173 = vunpack.c.h.b16 %v2032
    %v2174 = vunpack.c.l.b16 %v2033
    %v2175 = vunpack.c.h.b16 %v2033
    %v2176 = vunpack.c.l.b16 %v2034
    %v2177 = vunpack.c.h.b16 %v2034
    %v2178 = vunpack.c.l.b16 %v2035
    %v2179 = vunpack.c.h.b16 %v2035
    %v2180 = vunpack.c.l.b16 %v2036
    %v2181 = vunpack.c.h.b16 %v2036
    %v2182 = vunpack.c.l.b16 %v2037
    %v2183 = vunpack.c.h.b16 %v2037
    %v2184 = vunpack.c.l.b16 %v2038
    %v2185 = vunpack.c.h.b16 %v2038
    %v2186 = vunpack.c.l.b16 %v2039
    %v2187 = vunpack.c.h.b16 %v2039
    %v2188 = vunpack.c.l.b16 %v2040
    %v2189 = vunpack.c.h.b16 %v2040
    %v2190 = vunpack.c.l.b16 %v2041
    %v2191 = vunpack.c.h.b16 %v2041
    %v2192 = vunpack.c.l.b16 %v2042
    %v2193 = vunpack.c.h.b16 %v2042
    %v2194 = vunpack.c.l.b16 %v2043
    %v2195 = vunpack.c.h.b16 %v2043
    %v2196 = vunpack.c.l.b16 %v2044
    %v2197 = vunpack.c.h.b16 %v2044
    %v2198 = vunpack.c.l.b16 %v2045
    %v2199 = vunpack.c.h.b16 %v2045
    %v2200 = vunpack.c.l.b16 %v2046
    %v2201 = vunpack.c.h.b16 %v2046
    %v2202 = vunpack.c.l.b16 %v2047
    %v2203 = vunpack.c.h.b16 %v2047
    %v2204 = vunpack.c.l.b16 %v2048
    %v2205 = vunpack.c.h.b16 %v2048
    %v2206 = vunpack.c.l.b16 %v2049
    %v2207 = vunpack.c.h.b16 %v2049
    %v2208 = vunpack.c.l.b16 %v2050
    %v2209 = vunpack.c.h.b16 %v2050
    %v2210 = vunpack.c.l.b16 %v2051
    %v2211 = vunpack.c.h.b16 %v2051
    %v2212 = vunpack.c.l.b16 %v2052
    %v2213 = vunpack.c.h.b16 %v2052
    %v2214 = vunpack.c.l.b16 %v2053
    %v2215 = vunpack.c.h.b16 %v2053
    %v2216 = vunpack.c.l.b16 %v2054
    %v2217 = vunpack.c.h.b16 %v2054
    %v2218 = vunpack.c.l.b16 %v2055
    %v2219 = vunpack.c.h.b16 %v2055
    %v2220 = vunpack.c.l.b16 %v2056
    %v2221 = vunpack.c.h.b16 %v2056
    %v2222 = vunpack.c.l.b16 %v2057
    %v2223 = vunpack.c.h.b16 %v2057
    %v2224 = vunpack.c.l.b16 %v2058
    %v2225 = vunpack.c.h.b16 %v2058
    %v2226 = vunpack.c.l.b16 %v2059
    %v2227 = vunpack.c.h.b16 %v2059
    %v2228 = vunpack.c.l.b16 %v2060
    %v2229 = vunpack.c.h.b16 %v2060
    %v2230 = vunpack.c.l.b16 %v2061
    %v2231 = vunpack.c.h.b16 %v2061
    %v2232 = vunpack.c.l.b16 %v2062
    %v2233 = vunpack.c.h.b16 %v2062
    %v2234 = vunpack.c.l.b16 %v2063
    %v2235 = vunpack.c.h.b16 %v2063
    %v2236 = vunpack.c.l.b16 %v2064
    %v2237 = vunpack.c.h.b16 %v2064
    %v2238 = vunpack.c.l.b16 %v2065
    %v2239 = vunpack.c.h.b16 %v2065
    %v2240 = vunpack.c.l.b16 %v2066
    %v2241 = vunpack.c.h.b16 %v2066
    %v2242 = vunpack.c.l.b16 %v2067
    %v2243 = vunpack.c.h.b16 %v2067
    %v2244 = vunpack.c.l.b16 %v2068
    %v2245 = vunpack.c.h.b16 %v2068
    %v2246 = vunpack.c.l.b16 %v2069
    %v2247 = vunpack.c.h.b16 %v2069
    %v2248 = vunpack.c.l.b16 %v2070
    %v2249 = vunpack.c.h.b16 %v2070
    %v2250 = vunpack.c.l.b16 %v2071
    %v2251 = vunpack.c.h.b16 %v2071
    %v2252 = vunpack.c.l.b16 %v2072
    %v2253 = vunpack.c.h.b16 %v2072
    %v2254 = vunpack.c.l.b16 %v2073
    %v2255 = vunpack.c.h.b16 %v2073
    %v2256 = vunpack.c.l.b16 %v2074
    %v2257 = vunpack.c.h.b16 %v2074
    %v2258 = vunpack.c.l.b16 %v2075
    %v2259 = vunpack.c.h.b16 %v2075
    %v2260 = vunpack.c.l.b16 %v2076
    %v2261 = vunpack.c.h.b16 %v2076
    %v2262 = vunpack.c.l.b16 %v2077
    %v2263 = vunpack.c.h.b16 %v2077
    %v2264 = vunpack.c.l.b16 %v2078
    %v2265 = vunpack.c.h.b16 %v2078
    %v2266 = vunpack.c.l.b16 %v2079
    %v2267 = vunpack.c.h.b16 %v2079
    %v2268 = vunpack.c.l.b16 %v2080
    %v2269 = vunpack.c.h.b16 %v2080
    %v2270 = vunpack.c.l.b16 %v2081
    %v2271 = vunpack.c.h.b16 %v2081
    %v2272 = vunpack.c.l.b16 %v2082
    %v2273 = vunpack.c.h.b16 %v2082
    %v2274 = vunpack.c.l.b16 %v2083
    %v2275 = vunpack.c.h.b16 %v2083
    %v2276 = vpack.c.b16 %v2150, %v2148
    %v2277 = vpack.c.b16 %v2151, %v2149
    %v2278 = vpack.c.b16 %v2154, %v2152
    %v2279 = vpack.c.b16 %v2155, %v2153
    %v2280 = vpack.c.b16 %v2158, %v2156
    %v2281 = vpack.c.b16 %v2159, %v2157
    %v2282 = vpack.c.b16 %v2162, %v2160
    %v2283 = vpack.c.b16 %v2163, %v2161
    %v2284 = vpack.c.b16 %v2166, %v2164
    %v2285 = vpack.c.b16 %v2167, %v2165
    %v2286 = vpack.c.b16 %v2170, %v2168
    %v2287 = vpack.c.b16 %v2171, %v2169
    %v2288 = vpack.c.b16 %v2174, %v2172
    %v2289 = vpack.c.b16 %v2175, %v2173
    %v2290 = vpack.c.b16 %v2178, %v2176
    %v2291 = vpack.c.b16 %v2179, %v2177
    %v2292 = vpack.c.b16 %v2182, %v2180
    %v2293 = vpack.c.b16 %v2183, %v2181
    %v2294 = vpack.c.b16 %v2186, %v2184
    %v2295 = vpack.c.b16 %v2187, %v2185
    %v2296 = vpack.c.b16 %v2190, %v2188
    %v2297 = vpack.c.b16 %v2191, %v2189
    %v2298 = vpack.c.b16 %v2194, %v2192
    %v2299 = vpack.c.b16 %v2195, %v2193
    %v2300 = vpack.c.b16 %v2198, %v2196
    %v2301 = vpack.c.b16 %v2199, %v2197
    %v2302 = vpack.c.b16 %v2202, %v2200
    %v2303 = vpack.c.b16 %v2203, %v2201
    %v2304 = vpack.c.b16 %v2206, %v2204
    %v2305 = vpack.c.b16 %v2207, %v2205
    %v2306 = vpack.c.b16 %v2210, %v2208
    %v2307 = vpack.c.b16 %v2211, %v2209
    %v2308 = vpack.c.b16 %v2214, %v2212
    %v2309 = vpack.c.b16 %v2215, %v2213
    %v2310 = vpack.c.b16 %v2218, %v2216
    %v2311 = vpack.c.b16 %v2219, %v2217
    %v2312 = vpack.c.b16 %v2222, %v2220
    %v2313 = vpack.c.b16 %v2223, %v2221
    %v2314 = vpack.c.b16 %v2226, %v2224
    %v2315 = vpack.c.b16 %v2227, %v2225
    %v2316 = vpack.c.b16 %v2230, %v2228
    %v2317 = vpack.c.b16 %v2231, %v2229
    %v2318 = vpack.c.b16 %v2234, %v2232
    %v2319 = vpack.c.b16 %v2235, %v2233
    %v2320 = vpack.c.b16 %v2238, %v2236
    %v2321 = vpack.c.b16 %v2239, %v2237
    %v2322 = vpack.c.b16 %v2242, %v2240
    %v2323 = vpack.c.b16 %v2243, %v2241
    %v2324 = vpack.c.b16 %v2246, %v2244
    %v2325 = vpack.c.b16 %v2247, %v2245
    %v2326 = vpack.c.b16 %v2250, %v2248
    %v2327 = vpack.c.b16 %v2251, %v2249
    %v2328 = vpack.c.b16 %v2254, %v2252
    %v2329 = vpack.c.b16 %v2255, %v2253
    %v2330 = vpack.c.b16 %v2258, %v2256
    %v2331 = vpack.c.b16 %v2259, %v2257
    %v2332 = vpack.c.b16 %v2262, %v2260
    %v2333 = vpack.c.b16 %v2263, %v2261
    %v2334 = vpack.c.b16 %v2266, %v2264
    %v2335 = vpack.c.b16 %v2267, %v2265
    %v2336 = vpack.c.b16 %v2270, %v2268
    %v2337 = vpack.c.b16 %v2271, %v2269
    %v2338 = vpack.c.b16 %v2274, %v2272
    %v2339 = vpack.c.b16 %v2275, %v2273
    %2404 = vmatprep.subr.bf16.mxu0 %v2277
    %2405 = vmatpush1.bf16.msra.mxu0 %v2276
    %2406 = vmatprep.subr.bf16.mxu0 %v2279
    %2407 = vmatpush1.bf16.msra.mxu0 %v2278
    %2408 = vmatprep.subr.bf16.mxu0 %v2281
    %2409 = vmatpush1.bf16.msra.mxu0 %v2280
    %2410 = vmatprep.subr.bf16.mxu0 %v2283
    %2411 = vmatpush1.bf16.msra.mxu0 %v2282
    %2412 = vmatprep.subr.bf16.mxu0 %v2285
    %2413 = vmatpush1.bf16.msra.mxu0 %v2284
    %2414 = vmatprep.subr.bf16.mxu0 %v2287
    %2415 = vmatpush1.bf16.msra.mxu0 %v2286
    %2416 = vmatprep.subr.bf16.mxu0 %v2289
    %2417 = vmatpush1.bf16.msra.mxu0 %v2288
    %2418 = vmatprep.subr.bf16.mxu0 %v2291
    %2419 = vmatpush1.bf16.msra.mxu0 %v2290
    %2420 = vmatprep.subr.bf16.mxu0 %v2293
    %2421 = vmatpush1.bf16.msra.mxu0 %v2292
    %2422 = vmatprep.subr.bf16.mxu0 %v2295
    %2423 = vmatpush1.bf16.msra.mxu0 %v2294
    %2424 = vmatprep.subr.bf16.mxu0 %v2297
    %2425 = vmatpush1.bf16.msra.mxu0 %v2296
    %2426 = vmatprep.subr.bf16.mxu0 %v2299
    %2427 = vmatpush1.bf16.msra.mxu0 %v2298
    %2428 = vmatprep.subr.bf16.mxu0 %v2301
    %2429 = vmatpush1.bf16.msra.mxu0 %v2300
    %2430 = vmatprep.subr.bf16.mxu0 %v2303
    %2431 = vmatpush1.bf16.msra.mxu0 %v2302
    %2432 = vmatprep.subr.bf16.mxu0 %v2305
    %2433 = vmatpush1.bf16.msra.mxu0 %v2304
    %2434 = vmatprep.subr.bf16.mxu0 %v2307
    %2435 = vmatpush1.bf16.msra.mxu0 %v2306
    %2436 = vmatprep.mubr.bf16.mxu0 %v2017
    %2437 = vmatmul.mubr.bf16.gmra.mrb[0].mxu0 %v2016
    %v2438 = vpop.f32.mrb[0].mxu0
    %v2439 = vadd.f32 0.0, %v2438
    %v2440 = vpop.f32.mrb[0].mxu0
    %v2441 = vadd.f32 0.0, %v2440
    %v2442 = vpop.f32.mrb[0].mxu0
    %v2443 = vpop.f32.mrb[0].mxu0
    %2444 = vdwg.mxu0
    %2445 = vmatprep.subr.bf16.mxu0 %v2309
    %2446 = vmatpush1.bf16.msra.mxu0 %v2308
    %2447 = vmatprep.subr.bf16.mxu0 %v2311
    %2448 = vmatpush1.bf16.msra.mxu0 %v2310
    %2449 = vmatprep.subr.bf16.mxu0 %v2313
    %2450 = vmatpush1.bf16.msra.mxu0 %v2312
    %2451 = vmatprep.subr.bf16.mxu0 %v2315
    %2452 = vmatpush1.bf16.msra.mxu0 %v2314
    %2453 = vmatprep.subr.bf16.mxu0 %v2317
    %2454 = vmatpush1.bf16.msra.mxu0 %v2316
    %2455 = vmatprep.subr.bf16.mxu0 %v2319
    %2456 = vmatpush1.bf16.msra.mxu0 %v2318
    %2457 = vmatprep.subr.bf16.mxu0 %v2321
    %2458 = vmatpush1.bf16.msra.mxu0 %v2320
    %2459 = vmatprep.subr.bf16.mxu0 %v2323
    %2460 = vmatpush1.bf16.msra.mxu0 %v2322
    %2461 = vmatprep.subr.bf16.mxu0 %v2325
    %2462 = vmatpush1.bf16.msra.mxu0 %v2324
    %2463 = vmatprep.subr.bf16.mxu0 %v2327
    %2464 = vmatpush1.bf16.msra.mxu0 %v2326
    %2465 = vmatprep.subr.bf16.mxu0 %v2329
    %2466 = vmatpush1.bf16.msra.mxu0 %v2328
    %2467 = vmatprep.subr.bf16.mxu0 %v2331
    %2468 = vmatpush1.bf16.msra.mxu0 %v2330
    %2469 = vmatprep.subr.bf16.mxu0 %v2333
    %2470 = vmatpush1.bf16.msra.mxu0 %v2332
    %2471 = vmatprep.subr.bf16.mxu0 %v2335
    %2472 = vmatpush1.bf16.msra.mxu0 %v2334
    %2473 = vmatprep.subr.bf16.mxu0 %v2337
    %2474 = vmatpush1.bf16.msra.mxu0 %v2336
    %2475 = vmatprep.subr.bf16.mxu0 %v2339
    %2476 = vmatpush1.bf16.msra.mxu0 %v2338
    %2477 = vmatprep.mubr.bf16.mxu0 %v2019
    %2478 = vmatmul.mubr.bf16.gmra.mrb[0].mxu0 %v2018
    %v2479 = vpop.f32.mrb[0].mxu0
    %v2480 = vadd.f32 %v2439, %v2479
    %v2481 = vpop.f32.mrb[0].mxu0
    %v2482 = vadd.f32 %v2441, %v2481
    %v2483 = vpop.f32.mrb[0].mxu0
    %v2484 = vpop.f32.mrb[0].mxu0
    %2485 = vdwg.mxu0
    %v2487 = vlaneseq
    %v2488 = vshrl.u32 %v2487, 7
    %v2489 = vsub.s32 0, %v2488
    %v2490 = vrot.slane %v28, %v2489
    %v2491 = vlaneseq
    %v2492 = vshrl.u32 %v2491, 7
    %v2493 = vsub.s32 1, %v2492
    %v2494 = vrot.slane %v28, %v2493
    %v2497 = vmul.f32 %v2480, %v2490
    %v2498 = vmul.f32 %v2482, %v2494
    %v2500 = vlaneseq
    %v2501 = vshrl.u32 %v2500, 7
    %v2502 = vsub.s32 0, %v2501
    %v2503 = vrot.slane %v29, %v2502
    %v2504 = vlaneseq
    %v2505 = vshrl.u32 %v2504, 7
    %v2506 = vsub.s32 1, %v2505
    %v2507 = vrot.slane %v29, %v2506
    %v2510 = vadd.f32 %v2497, %v2503
    %v2511 = vadd.f32 %v2498, %v2507
    %v2512 = vmax.f32 %v2510, 0.0
    %v2513 = vmax.f32 %v2511, 0.0
    %v2514 = vpack.c.bf16 %v2512, %v2512
    %v2515 = vpack.c.bf16 %v2513, %v2513
    %v2516 = vld [vmem:[%s4] sm:$0xf]
    %v2517 = vld [vmem:[%s4 + $0x4] sm:$0xf]
    %v2518 = vld [vmem:[%s4 + $0x8] sm:$0xf]
    %v2519 = vld [vmem:[%s4 + $0xc] sm:$0xf]
    %v2520 = vld [vmem:[%s4 + $0x10] sm:$0xf]
    %v2521 = vld [vmem:[%s4 + $0x14] sm:$0xf]
    %v2522 = vld [vmem:[%s4 + $0x18] sm:$0xf]
    %v2523 = vld [vmem:[%s4 + $0x1c] sm:$0xf]
    %v2524 = vld [vmem:[%s4 + $0x20] sm:$0xf]
    %v2525 = vld [vmem:[%s4 + $0x24] sm:$0xf]
    %v2526 = vld [vmem:[%s4 + $0x28] sm:$0xf]
    %v2527 = vld [vmem:[%s4 + $0x2c] sm:$0xf]
    %v2528 = vld [vmem:[%s4 + $0x30] sm:$0xf]
    %v2529 = vld [vmem:[%s4 + $0x34] sm:$0xf]
    %v2530 = vld [vmem:[%s4 + $0x38] sm:$0xf]
    %v2531 = vld [vmem:[%s4 + $0x3c] sm:$0xf]
    %v2532 = vld [vmem:[%s4 + $0x40] sm:$0xf]
    %v2533 = vld [vmem:[%s4 + $0x44] sm:$0xf]
    %v2534 = vld [vmem:[%s4 + $0x48] sm:$0xf]
    %v2535 = vld [vmem:[%s4 + $0x4c] sm:$0xf]
    %v2536 = vld [vmem:[%s4 + $0x50] sm:$0xf]
    %v2537 = vld [vmem:[%s4 + $0x54] sm:$0xf]
    %v2538 = vld [vmem:[%s4 + $0x58] sm:$0xf]
    %v2539 = vld [vmem:[%s4 + $0x5c] sm:$0xf]
    %v2540 = vld [vmem:[%s4 + $0x60] sm:$0xf]
    %v2541 = vld [vmem:[%s4 + $0x64] sm:$0xf]
    %v2542 = vld [vmem:[%s4 + $0x68] sm:$0xf]
    %v2543 = vld [vmem:[%s4 + $0x6c] sm:$0xf]
    %v2544 = vld [vmem:[%s4 + $0x70] sm:$0xf]
    %v2545 = vld [vmem:[%s4 + $0x74] sm:$0xf]
    %v2546 = vld [vmem:[%s4 + $0x78] sm:$0xf]
    %v2547 = vld [vmem:[%s4 + $0x7c] sm:$0xf]
    %v2549 = vlaneseq
    %v2550 = vshrl.u32 %v2549, 7
    %v2551 = vsub.s32 0, %v2550
    %v2552 = vrot.slane %v30, %v2551
    %v2586 = vunpack.c.l.b16 %v2516
    %v2587 = vunpack.c.l.b16 %v2517
    %v2588 = vunpack.c.l.b16 %v2518
    %v2589 = vunpack.c.l.b16 %v2519
    %v2590 = vunpack.c.l.b16 %v2520
    %v2591 = vunpack.c.l.b16 %v2521
    %v2592 = vunpack.c.l.b16 %v2522
    %v2593 = vunpack.c.l.b16 %v2523
    %v2594 = vunpack.c.l.b16 %v2524
    %v2595 = vunpack.c.l.b16 %v2525
    %v2596 = vunpack.c.l.b16 %v2526
    %v2597 = vunpack.c.l.b16 %v2527
    %v2598 = vunpack.c.l.b16 %v2528
    %v2599 = vunpack.c.l.b16 %v2529
    %v2600 = vunpack.c.l.b16 %v2530
    %v2601 = vunpack.c.l.b16 %v2531
    %v2602 = vunpack.c.l.b16 %v2532
    %v2603 = vunpack.c.l.b16 %v2533
    %v2604 = vunpack.c.l.b16 %v2534
    %v2605 = vunpack.c.l.b16 %v2535
    %v2606 = vunpack.c.l.b16 %v2536
    %v2607 = vunpack.c.l.b16 %v2537
    %v2608 = vunpack.c.l.b16 %v2538
    %v2609 = vunpack.c.l.b16 %v2539
    %v2610 = vunpack.c.l.b16 %v2540
    %v2611 = vunpack.c.l.b16 %v2541
    %v2612 = vunpack.c.l.b16 %v2542
    %v2613 = vunpack.c.l.b16 %v2543
    %v2614 = vunpack.c.l.b16 %v2544
    %v2615 = vunpack.c.l.b16 %v2545
    %v2616 = vunpack.c.l.b16 %v2546
    %v2617 = vunpack.c.l.b16 %v2547
    %v2618 = vpack.c.b16 %v2587, %v2586
    %v2619 = vpack.c.b16 %v2589, %v2588
    %v2620 = vpack.c.b16 %v2591, %v2590
    %v2621 = vpack.c.b16 %v2593, %v2592
    %v2622 = vpack.c.b16 %v2595, %v2594
    %v2623 = vpack.c.b16 %v2597, %v2596
    %v2624 = vpack.c.b16 %v2599, %v2598
    %v2625 = vpack.c.b16 %v2601, %v2600
    %v2626 = vpack.c.b16 %v2603, %v2602
    %v2627 = vpack.c.b16 %v2605, %v2604
    %v2628 = vpack.c.b16 %v2607, %v2606
    %v2629 = vpack.c.b16 %v2609, %v2608
    %v2630 = vpack.c.b16 %v2611, %v2610
    %v2631 = vpack.c.b16 %v2613, %v2612
    %v2632 = vpack.c.b16 %v2615, %v2614
    %v2633 = vpack.c.b16 %v2617, %v2616
    %2650 = vmatprep.subr.bf16.mxu0 0
    %2651 = vmatpush1.bf16.msra.mxu0 %v2618
    %2652 = vmatprep.subr.bf16.mxu0 0
    %2653 = vmatpush1.bf16.msra.mxu0 %v2619
    %2654 = vmatprep.subr.bf16.mxu0 0
    %2655 = vmatpush1.bf16.msra.mxu0 %v2620
    %2656 = vmatprep.subr.bf16.mxu0 0
    %2657 = vmatpush1.bf16.msra.mxu0 %v2621
    %2658 = vmatprep.subr.bf16.mxu0 0
    %2659 = vmatpush1.bf16.msra.mxu0 %v2622
    %2660 = vmatprep.subr.bf16.mxu0 0
    %2661 = vmatpush1.bf16.msra.mxu0 %v2623
    %2662 = vmatprep.subr.bf16.mxu0 0
    %2663 = vmatpush1.bf16.msra.mxu0 %v2624
    %2664 = vmatprep.subr.bf16.mxu0 0
    %2665 = vmatpush1.bf16.msra.mxu0 %v2625
    %2666 = vmatprep.subr.bf16.mxu0 0
    %2667 = vmatpush1.bf16.msra.mxu0 %v2626
    %2668 = vmatprep.subr.bf16.mxu0 0
    %2669 = vmatpush1.bf16.msra.mxu0 %v2627
    %2670 = vmatprep.subr.bf16.mxu0 0
    %2671 = vmatpush1.bf16.msra.mxu0 %v2628
    %2672 = vmatprep.subr.bf16.mxu0 0
    %2673 = vmatpush1.bf16.msra.mxu0 %v2629
    %2674 = vmatprep.subr.bf16.mxu0 0
    %2675 = vmatpush1.bf16.msra.mxu0 %v2630
    %2676 = vmatprep.subr.bf16.mxu0 0
    %2677 = vmatpush1.bf16.msra.mxu0 %v2631
    %2678 = vmatprep.subr.bf16.mxu0 0
    %2679 = vmatpush1.bf16.msra.mxu0 %v2632
    %2680 = vmatprep.subr.bf16.mxu0 0
    %2681 = vmatpush1.bf16.msra.mxu0 %v2633
    %2682 = vmatprep.mubr.bf16.mxu0 %v2515
    %2683 = vmatmul.mubr.bf16.gmra.mrb[0].mxu0 %v2514
    %v2684 = vpop.f32.mrb[0].mxu0
    %v2685 = vadd.f32 %v2552, %v2684
    %v2686 = vpop.f32.mrb[0].mxu0
    %v2687 = vpop.f32.mrb[0].mxu0
    %v2688 = vpop.f32.mrb[0].mxu0
    %2689 = vdwg.mxu0
    %2690 = vst [vmem:[#allocation2] sm:$0xff] %v2685
    // Predicated region
    $region26: #{forward.1} parent=1 // pred_check
      _
    $region27: #{forward.1} parent=1 // pred_check_branch
      %2692 = sbr.rel (0) target = $region29
    $region28: #{forward.1} parent=1 // pred_region
      %s2694 = ssub.s32 128, 128
      %2695 = vsyncadd [#allocation3], %s2694
      %s2697 = sshll.u32 [#allocation2], 4
      %s2698 = int_to_ptr.vmem [resolvable:$true] %s2697
      %2700 = dma.vmem_to_hbm [thread:$0]  %s2698, 128, %s6, [#allocation3]
    $region29: #{forward.1} parent=1 // pred_fallthru
      _
    // Predicated region
    $region30: #{forward.1} parent=1 // pred_check
      _
    $region31: #{forward.1} parent=1 // pred_check_branch
      %2702 = sbr.rel (0) target = $region33
    $region32: #{forward.1} parent=1 // pred_region
      %2703 = dma.done [#allocation3], 128
    $region33: #{forward.1} parent=1 // pred_fallthru
      _
    %2704 = vsyncpa [#allocation3], 1

</llo_original>
